<compile_context>
chip_gen: v7x
topology: tpu7x:2x2x1
jax: 0.10.0
libtpu: 0.0.40
codegen_flags: <defaults>
</compile_context>

<pallas_src>
import functools

import numpy as np
import jax
import jax.numpy as jnp
from jax import lax
from jax.experimental import pallas as pl
from jax.experimental.pallas import tpu as pltpu

EPS = 1e-5


def _round_up(v, m):
    return (v + m - 1) // m * m


# --------------------------------------------------------------------------
# Pallas kernel: one batch block per grid step, everything fused.
# Layout: channels on sublanes (padded to 8), batch*H*W on the lane axis.
# --------------------------------------------------------------------------
def _decoder_kernel(x_ref, s_ref, up_ref, mask_ref,
                    wg_ref, ws_ref, wpsi_ref, w1_ref, w2_ref, aff_ref,
                    o_ref, *, W, mxu_dtype):
    f32 = jnp.float32
    N = s_ref.shape[1]                 # BB * H * W  (lane axis, multiple of 128)

    aff = aff_ref[...]                 # (Cp, 9)  packed BN scale/shift + psi bias
    mask = mask_ref[...]               # (9, N)   3x3-tap border masks
    s_flat = s_ref[...]                # (Cp, N)  skip connection (zero-padded rows)

    # ---- bilinear x2 upsample fused as one matmul vs block-diag kron(UH, UW)
    x_up = jnp.dot(x_ref[...].astype(mxu_dtype), up_ref[...],
                   preferred_element_type=f32)                        # (C0p, N)

    # ---- attention gate: 1x1 convs are channel matmuls (MXU), BN folded ----
    g = jnp.dot(wg_ref[...], x_up.astype(mxu_dtype), preferred_element_type=f32)
    g = g * aff[:, 0:1] + aff[:, 1:2]
    t = jnp.dot(ws_ref[...], s_flat.astype(mxu_dtype), preferred_element_type=f32)
    t = t * aff[:, 2:3] + aff[:, 3:4]
    a = jnp.maximum(g + t, 0.0)
    psi = jnp.dot(wpsi_ref[...], a.astype(mxu_dtype), preferred_element_type=f32)
    psi = jax.nn.sigmoid(psi + aff[:, 4:5])
    s_att = psi * s_flat                                              # (Cp, N)

    # ---- 3x3 "same" conv as a single im2col matmul; taps via XLU roll + mask.
    def im2col(v):                     # (Cpad, N) -> (9*Cpad, N)
        taps = []
        for ky in range(3):
            for kx in range(3):
                tap = ky * 3 + kx
                delta = (ky - 1) * W + (kx - 1)     # offset in flattened h*W + w
                r = v if delta == 0 else pltpu.roll(v, (-delta) % N, 1)
                taps.append(r * mask[tap:tap + 1, :])
        return jnp.concatenate(taps, axis=0)        # sublane-aligned blocks

    # conv1 over cat([x_up, s_att]) -- the concat never touches HBM.
    cat = jnp.concatenate([x_up, s_att], axis=0)                      # (C0p+Cp, N)
    h1 = jnp.dot(w1_ref[...], im2col(cat).astype(mxu_dtype),
                 preferred_element_type=f32)
    h1 = jnp.maximum(h1 * aff[:, 5:6] + aff[:, 6:7], 0.0)             # (Cp, N)

    # conv2
    h2 = jnp.dot(w2_ref[...], im2col(h1).astype(mxu_dtype),
                 preferred_element_type=f32)
    o_ref[...] = jnp.maximum(h2 * aff[:, 7:8] + aff[:, 8:9], 0.0)     # lane-dense store


# --------------------------------------------------------------------------
# Host-side constant builders (numpy)
# --------------------------------------------------------------------------
def _bilinear_up2_matrix(n):
    """(2n, n) interpolation matrix for scale-2 bilinear, align_corners=False."""
    m = np.zeros((2 * n, n), dtype=np.float32)
    for i in range(2 * n):
        src = max((i + 0.5) / 2.0 - 0.5, 0.0)
        i0 = min(int(np.floor(src)), n - 1)
        frac = src - i0
        i1 = min(i0 + 1, n - 1)
        m[i, i0] += 1.0 - frac
        m[i, i1] += frac
    return m


def _upsample_matrix(h0, w0, bb):
    """Block-diag (bb*h0*w0, bb*4*h0*w0) matrix: x_flat @ M == bilinear x2."""
    k = np.kron(_bilinear_up2_matrix(h0), _bilinear_up2_matrix(w0)).T  # (h0*w0, 4*h0*w0)
    hw0, hw = h0 * w0, 4 * h0 * w0
    m = np.zeros((bb * hw0, bb * hw), dtype=np.float32)
    for b in range(bb):
        m[b * hw0:(b + 1) * hw0, b * hw:(b + 1) * hw] = k
    return m


def _tap_masks(h, w, bb):
    """(9, bb*h*w) validity masks for the 9 taps of a 3x3 padded convolution."""
    idx = np.arange(bb * h * w)
    wp = idx % w
    hp = (idx // w) % h
    m = np.zeros((9, bb * h * w), dtype=np.float32)
    t = 0
    for dy in (-1, 0, 1):
        for dx in (-1, 0, 1):
            valid = (hp + dy >= 0) & (hp + dy < h) & (wp + dx >= 0) & (wp + dx < w)
            m[t] = valid.astype(np.float32)
            t += 1
    return m


def _fold_bn(bias, gamma, beta, mean, var):
    scale = gamma / jnp.sqrt(var + EPS)
    shift = (bias - mean) * scale + beta
    return scale, shift


# --------------------------------------------------------------------------
# Wrapper (NCHW in / NCHW out, like the PyTorch module)
# --------------------------------------------------------------------------
def decoder_block_forward(x, s, p, *, mxu_dtype=jnp.bfloat16, batch_block=None):
    B, C0, H0, W0 = x.shape
    _, C1, H, W = s.shape
    assert H == 2 * H0 and W == 2 * W0
    Cout = p['wg'].shape[0]
    assert C1 == Cout, "AttentionGate's `out * s` requires skip channels == out channels"

    BB = B if batch_block is None else batch_block
    assert B % BB == 0 and (BB == B or (BB * H * W) % 128 == 0)
    Nblk, Mblk = BB * H * W, BB * H0 * W0
    Cp = _round_up(Cout, 8)
    C0p = _round_up(C0, 8)
    f32 = jnp.float32

    # ---- activations: channels on sublanes (zero-padded), B*H*W on lanes ----
    x_flat = jnp.pad(jnp.transpose(x, (1, 0, 2, 3)).reshape(C0, B * H0 * W0),
                     ((0, C0p - C0), (0, 0))).astype(f32)
    s_flat = jnp.pad(jnp.transpose(s, (1, 0, 2, 3)).reshape(C1, B * H * W),
                     ((0, Cp - C1), (0, 0))).astype(f32)

    # ---- constants: upsample matrix, border masks, folded BN, packed weights ----
    up = jnp.asarray(_upsample_matrix(H0, W0, BB)).astype(mxu_dtype)
    mask = jnp.asarray(_tap_masks(H, W, BB))

    gsc, gsh = _fold_bn(p['bg'], p['gg'], p['bg_bn'], p['mg'], p['vg'])
    ssc, ssh = _fold_bn(p['bs'], p['gs'], p['bs_bn'], p['ms'], p['vs'])
    c1sc, c1sh = _fold_bn(p['b1'], p['g1'], p['be1'], p['m1'], p['v1'])
    c2sc, c2sh = _fold_bn(p['b2'], p['g2'], p['be2'], p['m2'], p['v2'])
    aff = jnp.stack([gsc, gsh, ssc, ssh, p['bpsi'], c1sc, c1sh, c2sc, c2sh], axis=1)
    aff = jnp.pad(aff.astype(f32), ((0, Cp - Cout), (0, 0)))           # (Cp, 9)

    wg = jnp.pad(p['wg'], ((0, Cp - Cout), (0, C0p - C0))).astype(mxu_dtype)
    ws = jnp.pad(p['ws'], ((0, Cp - Cout), (0, Cp - C1))).astype(mxu_dtype)
    wpsi = jnp.pad(p['wpsi'], ((0, Cp - Cout), (0, Cp - Cout))).astype(mxu_dtype)

    # OIHW -> (O, ky, kx, I); split I into x / s halves (the concat is fused),
    # zero-pad to the padded channel counts, flatten to (Cp, 9*(C0p+Cp)).
    w1 = jnp.transpose(p['w1'], (0, 2, 3, 1))
    w1x = jnp.pad(w1[..., :C0], ((0, Cp - Cout), (0, 0), (0, 0), (0, C0p - C0)))
    w1s = jnp.pad(w1[..., C0:], ((0, Cp - Cout), (0, 0), (0, 0), (0, Cp - Cout)))
    w1mat = jnp.concatenate([w1x, w1s], axis=-1).reshape(
        Cp, 9 * (C0p + Cp)).astype(mxu_dtype)

    w2 = jnp.transpose(p['w2'], (0, 2, 3, 1))
    w2mat = jnp.pad(w2, ((0, Cp - Cout), (0, 0), (0, 0), (0, Cp - Cout))
                    ).reshape(Cp, 9 * Cp).astype(mxu_dtype)

    kernel = functools.partial(_decoder_kernel, W=W, mxu_dtype=mxu_dtype)
    const = lambda i: (0, 0)

    # NOTE: weight/constant blocks never change index; with a larger grid they
    # could also be single-buffered via pipeline_mode=pl.Buffered(1).
    out_flat = pl.pallas_call(
        kernel,
        out_shape=jax.ShapeDtypeStruct((Cp, B * H * W), f32),
        grid=(B // BB,),
        in_specs=[
            pl.BlockSpec((C0p, Mblk), lambda i: (0, i)),     # x (low-res, flattened)
            pl.BlockSpec((Cp, Nblk), lambda i: (0, i)),      # skip connection
            pl.BlockSpec((Mblk, Nblk), const),               # upsample matrix
            pl.BlockSpec((9, Nblk), const),                  # 3x3 border masks
            pl.BlockSpec((Cp, C0p), const),                  # Wg
            pl.BlockSpec((Cp, Cp), const),                   # Ws
            pl.BlockSpec((Cp, Cp), const),                   # Wpsi
            pl.BlockSpec((Cp, 9 * (C0p + Cp)), const),       # conv1 im2col weight
            pl.BlockSpec((Cp, 9 * Cp), const),               # conv2 im2col weight
            pl.BlockSpec((Cp, 9), const),                    # packed scales/shifts/bias
        ],
        out_specs=pl.BlockSpec((Cp, Nblk), lambda i: (0, i)),
        compiler_params=pltpu.CompilerParams(
            dimension_semantics=("parallel",)),   # v7x: shard batch blocks over 2 TCs
    )(x_flat, s_flat, up, mask, wg, ws, wpsi, w1mat, w2mat, aff)

    out = out_flat[:Cout].reshape(Cout, B, H, W)
    return jnp.transpose(out, (1, 0, 2, 3))                  # back to NCHW


# --------------------------------------------------------------------------
# Pure-JAX reference (mirrors the PyTorch forward, eval-mode BN)
# --------------------------------------------------------------------------
def upsample_bilinear_x2(x_nchw):
    _, _, H, W = x_nchw.shape
    uh = jnp.asarray(_bilinear_up2_matrix(H))
    uw = jnp.asarray(_bilinear_up2_matrix(W))
    return jnp.einsum('Hh,bchw,Ww->bcHW', uh, x_nchw, uw)


def reference_forward(x, s, p):
    xu = upsample_bilinear_x2(x)

    def bn(y, g, b, m, v):
        return ((y - m[None, :, None, None]) /
                jnp.sqrt(v + EPS)[None, :, None, None]) * g[None, :, None, None] \
               + b[None, :, None, None]

    def conv1x1(y, w, b):
        return jnp.einsum('bchw,oc->bohw', y, w) + b[None, :, None, None]

    def conv3x3(y, w, b):
        return lax.conv_general_dilated(
            y, w, (1, 1), ((1, 1), (1, 1)),
            dimension_numbers=('NCHW', 'OIHW', 'NCHW')) + b[None, :, None, None]

    g = bn(conv1x1(xu, p['wg'], p['bg']), p['gg'], p['bg_bn'], p['mg'], p['vg'])
    t = bn(conv1x1(s, p['ws'], p['bs']), p['gs'], p['bs_bn'], p['ms'], p['vs'])
    a = jax.nn.relu(g + t)
    psi = jax.nn.sigmoid(conv1x1(a, p['wpsi'], p['bpsi']))
    s_att = psi * s
    cat = jnp.concatenate([xu, s_att], axis=1)
    h = jax.nn.relu(bn(conv3x3(cat, p['w1'], p['b1']),
                       p['g1'], p['be1'], p['m1'], p['v1']))
    out = jax.nn.relu(bn(conv3x3(h, p['w2'], p['b2']),
                         p['g2'], p['be2'], p['m2'], p['v2']))
    return out


# --------------------------------------------------------------------------
if __name__ == "__main__":
    # DecoderBlock(in_channels=(8, 4), out_channels=4); skip channels == out
    # channels is required by the `out * s` broadcast in AttentionGate.
    B, C0, C1, Cout = 2, 8, 4, 4
    H0 = W0 = 8                                # x is upsampled to 16x16

    key = jax.random.PRNGKey(0)
    ks = list(jax.random.split(key, 40))
    nrm = lambda k, shp, sc=1.0: sc * jax.random.normal(k, shp, jnp.float32)

    x = nrm(ks[0], (B, C0, H0, W0))
    s = nrm(ks[1], (B, C1, 2 * H0, 2 * W0))

    params = {
        # AttentionGate.Wg : Conv2d(C0 -> Cout, 1x1) + BN
        'wg': nrm(ks[2], (Cout, C0), 0.2), 'bg': nrm(ks[3], (Cout,), 0.1),
        'gg': 1.0 + nrm(ks[4], (Cout,), 0.1), 'bg_bn': nrm(ks[5], (Cout,), 0.1),
        'mg': nrm(ks[6], (Cout,), 0.1), 'vg': 0.5 + jax.random.uniform(ks[7], (Cout,)),
        # AttentionGate.Ws : Conv2d(C1 -> Cout, 1x1) + BN
        'ws': nrm(ks[8], (Cout, C1), 0.2), 'bs': nrm(ks[9], (Cout,), 0.1),
        'gs': 1.0 + nrm(ks[10], (Cout,), 0.1), 'bs_bn': nrm(ks[11], (Cout,), 0.1),
        'ms': nrm(ks[12], (Cout,), 0.1), 'vs': 0.5 + jax.random.uniform(ks[13], (Cout,)),
        # AttentionGate.output : Conv2d(Cout -> Cout, 1x1) + Sigmoid
        'wpsi': nrm(ks[14], (Cout, Cout), 0.2), 'bpsi': nrm(ks[15], (Cout,), 0.1),
        # DoubleConv.conv1 : Conv2d(C0+Cout -> Cout, 3x3) + BN
        'w1': nrm(ks[16], (Cout, C0 + Cout, 3, 3), 0.2), 'b1': nrm(ks[17], (Cout,), 0.1),
        'g1': 1.0 + nrm(ks[18], (Cout,), 0.1), 'be1': nrm(ks[19], (Cout,), 0.1),
        'm1': nrm(ks[20], (Cout,), 0.1), 'v1': 0.5 + jax.random.uniform(ks[21], (Cout,)),
        # DoubleConv.conv2 : Conv2d(Cout -> Cout, 3x3) + BN
        'w2': nrm(ks[22], (Cout, Cout, 3, 3), 0.2), 'b2': nrm(ks[23], (Cout,), 0.1),
        'g2': 1.0 + nrm(ks[24], (Cout,), 0.1), 'be2': nrm(ks[25], (Cout,), 0.1),
        'm2': nrm(ks[26], (Cout,), 0.1), 'v2': 0.5 + jax.random.uniform(ks[27], (Cout,)),
    }

    fwd = jax.jit(decoder_block_forward, static_argnames=("mxu_dtype", "batch_block"))
    ref = jax.block_until_ready(reference_forward(x, s, params))

    # exact-precision run (f32 MXU operands)
    out_f32 = jax.block_until_ready(fwd(x, s, params, mxu_dtype=jnp.float32))
    assert out_f32.shape == (B, Cout, 2 * H0, 2 * W0), out_f32.shape
    np.testing.assert_allclose(np.asarray(out_f32), np.asarray(ref),
                               rtol=1e-2, atol=1e-2)

    # default path: bf16 MXU operands (v6e/v7x fast path), f32 accumulation
    out_bf16 = jax.block_until_ready(fwd(x, s, params))
    np.testing.assert_allclose(np.asarray(out_bf16), np.asarray(ref),
                               rtol=5e-2, atol=5e-2)

    print("KERNEL_OK")
</pallas_src>

<mosaic_0001>
module attributes {stable_mosaic.version = 11 : i64} {
  func.func @_decoder_kernel(%arg0: i32, %arg1: memref<8x128xf32, #tpu.memory_space<vmem>>, %arg2: memref<8x512xf32, #tpu.memory_space<vmem>>, %arg3: memref<128x512xf32, #tpu.memory_space<vmem>>, %arg4: memref<9x512xf32, #tpu.memory_space<vmem>>, %arg5: memref<8x8xf32, #tpu.memory_space<vmem>>, %arg6: memref<8x8xf32, #tpu.memory_space<vmem>>, %arg7: memref<8x8xf32, #tpu.memory_space<vmem>>, %arg8: memref<8x144xf32, #tpu.memory_space<vmem>>, %arg9: memref<8x72xf32, #tpu.memory_space<vmem>>, %arg10: memref<8x9xf32, #tpu.memory_space<vmem>>, %arg11: memref<8x512xf32, #tpu.memory_space<vmem>>) attributes {dimension_semantics = [#tpu.dimension_semantics<parallel>], iteration_bounds = array<i64: 1>, scalar_prefetch = 0 : i64, scratch_operands = 0 : i64, tpu.core_type = #tpu.core_type<tc>, window_params = [{transform_indices = @transform_0, window_bounds = array<i64: 8, 128>}, {transform_indices = @transform_1, window_bounds = array<i64: 8, 512>}, {pipeline_mode = #tpu.pipeline_mode<synchronous>, transform_indices = @transform_2, window_bounds = array<i64: 128, 512>}, {pipeline_mode = #tpu.pipeline_mode<synchronous>, transform_indices = @transform_3, window_bounds = array<i64: 9, 512>}, {pipeline_mode = #tpu.pipeline_mode<synchronous>, transform_indices = @transform_4, window_bounds = array<i64: 8, 8>}, {pipeline_mode = #tpu.pipeline_mode<synchronous>, transform_indices = @transform_5, window_bounds = array<i64: 8, 8>}, {pipeline_mode = #tpu.pipeline_mode<synchronous>, transform_indices = @transform_6, window_bounds = array<i64: 8, 8>}, {pipeline_mode = #tpu.pipeline_mode<synchronous>, transform_indices = @transform_7, window_bounds = array<i64: 8, 144>}, {pipeline_mode = #tpu.pipeline_mode<synchronous>, transform_indices = @transform_8, window_bounds = array<i64: 8, 72>}, {pipeline_mode = #tpu.pipeline_mode<synchronous>, transform_indices = @transform_9, window_bounds = array<i64: 8, 9>}, {transform_indices = @transform_10, window_bounds = array<i64: 8, 512>}]} {
    %c0 = arith.constant 0 : index
    %c0_0 = arith.constant 0 : index
    %0 = vector.load %arg10[%c0, %c0_0] : memref<8x9xf32, #tpu.memory_space<vmem>>, vector<8x9xf32>
    %c0_1 = arith.constant 0 : index
    %c0_2 = arith.constant 0 : index
    %1 = vector.load %arg4[%c0_1, %c0_2] : memref<9x512xf32, #tpu.memory_space<vmem>>, vector<9x512xf32>
    %c0_3 = arith.constant 0 : index
    %c0_4 = arith.constant 0 : index
    %2 = vector.load %arg2[%c0_3, %c0_4] : memref<8x512xf32, #tpu.memory_space<vmem>>, vector<8x512xf32>
    %c0_5 = arith.constant 0 : index
    %c0_6 = arith.constant 0 : index
    %3 = vector.load %arg1[%c0_5, %c0_6] : memref<8x128xf32, #tpu.memory_space<vmem>>, vector<8x128xf32>
    %c0_7 = arith.constant 0 : index
    %c0_8 = arith.constant 0 : index
    %4 = vector.load %arg3[%c0_7, %c0_8] : memref<128x512xf32, #tpu.memory_space<vmem>>, vector<128x512xf32>
    %cst = arith.constant dense<0.000000e+00> : vector<8x512xf32>
    %5 = tpu.matmul %3, %4, %cst {dimension_numbers = #tpu.dot_dimension_numbers<[1], [0], [0], [1], [0, 0, 1, 1], [], []>} : vector<8x128xf32>, vector<128x512xf32>, vector<8x512xf32> -> vector<8x512xf32>
    %c0_9 = arith.constant 0 : index
    %c0_10 = arith.constant 0 : index
    %6 = vector.load %arg5[%c0_9, %c0_10] : memref<8x8xf32, #tpu.memory_space<vmem>>, vector<8x8xf32>
    %cst_11 = arith.constant dense<0.000000e+00> : vector<8x512xf32>
    %7 = tpu.matmul %6, %5, %cst_11 {dimension_numbers = #tpu.dot_dimension_numbers<[1], [0], [0], [1], [0, 0, 1, 1], [], []>} : vector<8x8xf32>, vector<8x512xf32>, vector<8x512xf32> -> vector<8x512xf32>
    %8 = vector.extract_strided_slice %0 {offsets = [0, 0], sizes = [8, 1], strides = [1, 1]} : vector<8x9xf32> to vector<8x1xf32>
    %9 = vector.broadcast %8 : vector<8x1xf32> to vector<8x512xf32>
    %10 = arith.mulf %7, %9 : vector<8x512xf32>
    %11 = vector.extract_strided_slice %0 {offsets = [0, 1], sizes = [8, 1], strides = [1, 1]} : vector<8x9xf32> to vector<8x1xf32>
    %12 = vector.broadcast %11 : vector<8x1xf32> to vector<8x512xf32>
    %13 = arith.addf %10, %12 : vector<8x512xf32>
    %c0_12 = arith.constant 0 : index
    %c0_13 = arith.constant 0 : index
    %14 = vector.load %arg6[%c0_12, %c0_13] : memref<8x8xf32, #tpu.memory_space<vmem>>, vector<8x8xf32>
    %cst_14 = arith.constant dense<0.000000e+00> : vector<8x512xf32>
    %15 = tpu.matmul %14, %2, %cst_14 {dimension_numbers = #tpu.dot_dimension_numbers<[1], [0], [0], [1], [0, 0, 1, 1], [], []>} : vector<8x8xf32>, vector<8x512xf32>, vector<8x512xf32> -> vector<8x512xf32>
    %16 = vector.extract_strided_slice %0 {offsets = [0, 2], sizes = [8, 1], strides = [1, 1]} : vector<8x9xf32> to vector<8x1xf32>
    %17 = vector.broadcast %16 : vector<8x1xf32> to vector<8x512xf32>
    %18 = arith.mulf %15, %17 : vector<8x512xf32>
    %19 = vector.extract_strided_slice %0 {offsets = [0, 3], sizes = [8, 1], strides = [1, 1]} : vector<8x9xf32> to vector<8x1xf32>
    %20 = vector.broadcast %19 : vector<8x1xf32> to vector<8x512xf32>
    %21 = arith.addf %18, %20 : vector<8x512xf32>
    %22 = arith.addf %13, %21 : vector<8x512xf32>
    %cst_15 = arith.constant 0.000000e+00 : f32
    %23 = vector.broadcast %cst_15 : f32 to vector<8x512xf32>
    %24 = arith.maximumf %22, %23 : vector<8x512xf32>
    %c0_16 = arith.constant 0 : index
    %c0_17 = arith.constant 0 : index
    %25 = vector.load %arg7[%c0_16, %c0_17] : memref<8x8xf32, #tpu.memory_space<vmem>>, vector<8x8xf32>
    %cst_18 = arith.constant dense<0.000000e+00> : vector<8x512xf32>
    %26 = tpu.matmul %25, %24, %cst_18 {dimension_numbers = #tpu.dot_dimension_numbers<[1], [0], [0], [1], [0, 0, 1, 1], [], []>} : vector<8x8xf32>, vector<8x512xf32>, vector<8x512xf32> -> vector<8x512xf32>
    %27 = vector.extract_strided_slice %0 {offsets = [0, 4], sizes = [8, 1], strides = [1, 1]} : vector<8x9xf32> to vector<8x1xf32>
    %28 = vector.broadcast %27 : vector<8x1xf32> to vector<8x512xf32>
    %29 = arith.addf %26, %28 : vector<8x512xf32>
    %30 = arith.negf %29 : vector<8x512xf32>
    %31 = math.exp %30 : vector<8x512xf32>
    %cst_19 = arith.constant 1.000000e+00 : f32
    %32 = vector.broadcast %cst_19 : f32 to vector<8x512xf32>
    %33 = arith.addf %32, %31 : vector<8x512xf32>
    %34 = arith.divf %32, %33 : vector<8x512xf32>
    %35 = arith.mulf %34, %2 : vector<8x512xf32>
    %36 = tpu.concatenate %5, %35 in 0 : vector<8x512xf32>, vector<8x512xf32> -> vector<16x512xf32>
    %c0_20 = arith.constant 0 : index
    %c0_21 = arith.constant 0 : index
    %37 = vector.load %arg8[%c0_20, %c0_21] : memref<8x144xf32, #tpu.memory_space<vmem>>, vector<8x144xf32>
    %c17_i32 = arith.constant 17 : i32
    %38 = tpu.dynamic_rotate %36 by %c17_i32 dim 1 : vector<16x512xf32>, i32 -> vector<16x512xf32>
    %39 = vector.extract_strided_slice %1 {offsets = [0, 0], sizes = [1, 512], strides = [1, 1]} : vector<9x512xf32> to vector<1x512xf32>
    %40 = vector.broadcast %39 : vector<1x512xf32> to vector<16x512xf32>
    %41 = arith.mulf %38, %40 : vector<16x512xf32>
    %c16_i32 = arith.constant 16 : i32
    %42 = tpu.dynamic_rotate %36 by %c16_i32 dim 1 : vector<16x512xf32>, i32 -> vector<16x512xf32>
    %43 = vector.extract_strided_slice %1 {offsets = [1, 0], sizes = [1, 512], strides = [1, 1]} : vector<9x512xf32> to vector<1x512xf32>
    %44 = vector.broadcast %43 : vector<1x512xf32> to vector<16x512xf32>
    %45 = arith.mulf %42, %44 : vector<16x512xf32>
    %c15_i32 = arith.constant 15 : i32
    %46 = tpu.dynamic_rotate %36 by %c15_i32 dim 1 : vector<16x512xf32>, i32 -> vector<16x512xf32>
    %47 = vector.extract_strided_slice %1 {offsets = [2, 0], sizes = [1, 512], strides = [1, 1]} : vector<9x512xf32> to vector<1x512xf32>
    %48 = vector.broadcast %47 : vector<1x512xf32> to vector<16x512xf32>
    %49 = arith.mulf %46, %48 : vector<16x512xf32>
    %c1_i32 = arith.constant 1 : i32
    %50 = tpu.dynamic_rotate %36 by %c1_i32 dim 1 : vector<16x512xf32>, i32 -> vector<16x512xf32>
    %51 = vector.extract_strided_slice %1 {offsets = [3, 0], sizes = [1, 512], strides = [1, 1]} : vector<9x512xf32> to vector<1x512xf32>
    %52 = vector.broadcast %51 : vector<1x512xf32> to vector<16x512xf32>
    %53 = arith.mulf %50, %52 : vector<16x512xf32>
    %54 = vector.extract_strided_slice %1 {offsets = [4, 0], sizes = [1, 512], strides = [1, 1]} : vector<9x512xf32> to vector<1x512xf32>
    %55 = vector.broadcast %54 : vector<1x512xf32> to vector<16x512xf32>
    %56 = arith.mulf %36, %55 : vector<16x512xf32>
    %c511_i32 = arith.constant 511 : i32
    %57 = tpu.dynamic_rotate %36 by %c511_i32 dim 1 : vector<16x512xf32>, i32 -> vector<16x512xf32>
    %58 = vector.extract_strided_slice %1 {offsets = [5, 0], sizes = [1, 512], strides = [1, 1]} : vector<9x512xf32> to vector<1x512xf32>
    %59 = vector.broadcast %58 : vector<1x512xf32> to vector<16x512xf32>
    %60 = arith.mulf %57, %59 : vector<16x512xf32>
    %c497_i32 = arith.constant 497 : i32
    %61 = tpu.dynamic_rotate %36 by %c497_i32 dim 1 : vector<16x512xf32>, i32 -> vector<16x512xf32>
    %62 = vector.extract_strided_slice %1 {offsets = [6, 0], sizes = [1, 512], strides = [1, 1]} : vector<9x512xf32> to vector<1x512xf32>
    %63 = vector.broadcast %62 : vector<1x512xf32> to vector<16x512xf32>
    %64 = arith.mulf %61, %63 : vector<16x512xf32>
    %c496_i32 = arith.constant 496 : i32
    %65 = tpu.dynamic_rotate %36 by %c496_i32 dim 1 : vector<16x512xf32>, i32 -> vector<16x512xf32>
    %66 = vector.extract_strided_slice %1 {offsets = [7, 0], sizes = [1, 512], strides = [1, 1]} : vector<9x512xf32> to vector<1x512xf32>
    %67 = vector.broadcast %66 : vector<1x512xf32> to vector<16x512xf32>
    %68 = arith.mulf %65, %67 : vector<16x512xf32>
    %c495_i32 = arith.constant 495 : i32
    %69 = tpu.dynamic_rotate %36 by %c495_i32 dim 1 : vector<16x512xf32>, i32 -> vector<16x512xf32>
    %70 = vector.extract_strided_slice %1 {offsets = [8, 0], sizes = [1, 512], strides = [1, 1]} : vector<9x512xf32> to vector<1x512xf32>
    %71 = vector.broadcast %70 : vector<1x512xf32> to vector<16x512xf32>
    %72 = arith.mulf %69, %71 : vector<16x512xf32>
    %73 = tpu.concatenate %41, %45, %49, %53, %56, %60, %64, %68, %72 in 0 : vector<16x512xf32>, vector<16x512xf32>, vector<16x512xf32>, vector<16x512xf32>, vector<16x512xf32>, vector<16x512xf32>, vector<16x512xf32>, vector<16x512xf32>, vector<16x512xf32> -> vector<144x512xf32>
    %cst_22 = arith.constant dense<0.000000e+00> : vector<8x512xf32>
    %74 = tpu.matmul %37, %73, %cst_22 {dimension_numbers = #tpu.dot_dimension_numbers<[1], [0], [0], [1], [0, 0, 1, 1], [], []>} : vector<8x144xf32>, vector<144x512xf32>, vector<8x512xf32> -> vector<8x512xf32>
    %75 = vector.extract_strided_slice %0 {offsets = [0, 5], sizes = [8, 1], strides = [1, 1]} : vector<8x9xf32> to vector<8x1xf32>
    %76 = vector.broadcast %75 : vector<8x1xf32> to vector<8x512xf32>
    %77 = arith.mulf %74, %76 : vector<8x512xf32>
    %78 = vector.extract_strided_slice %0 {offsets = [0, 6], sizes = [8, 1], strides = [1, 1]} : vector<8x9xf32> to vector<8x1xf32>
    %79 = vector.broadcast %78 : vector<8x1xf32> to vector<8x512xf32>
    %80 = arith.addf %77, %79 : vector<8x512xf32>
    %cst_23 = arith.constant 0.000000e+00 : f32
    %81 = vector.broadcast %cst_23 : f32 to vector<8x512xf32>
    %82 = arith.maximumf %80, %81 : vector<8x512xf32>
    %c0_24 = arith.constant 0 : index
    %c0_25 = arith.constant 0 : index
    %83 = vector.load %arg9[%c0_24, %c0_25] : memref<8x72xf32, #tpu.memory_space<vmem>>, vector<8x72xf32>
    %c17_i32_26 = arith.constant 17 : i32
    %84 = tpu.dynamic_rotate %82 by %c17_i32_26 dim 1 : vector<8x512xf32>, i32 -> vector<8x512xf32>
    %85 = vector.extract_strided_slice %1 {offsets = [0, 0], sizes = [1, 512], strides = [1, 1]} : vector<9x512xf32> to vector<1x512xf32>
    %86 = vector.broadcast %85 : vector<1x512xf32> to vector<8x512xf32>
    %87 = arith.mulf %84, %86 : vector<8x512xf32>
    %c16_i32_27 = arith.constant 16 : i32
    %88 = tpu.dynamic_rotate %82 by %c16_i32_27 dim 1 : vector<8x512xf32>, i32 -> vector<8x512xf32>
    %89 = vector.extract_strided_slice %1 {offsets = [1, 0], sizes = [1, 512], strides = [1, 1]} : vector<9x512xf32> to vector<1x512xf32>
    %90 = vector.broadcast %89 : vector<1x512xf32> to vector<8x512xf32>
    %91 = arith.mulf %88, %90 : vector<8x512xf32>
    %c15_i32_28 = arith.constant 15 : i32
    %92 = tpu.dynamic_rotate %82 by %c15_i32_28 dim 1 : vector<8x512xf32>, i32 -> vector<8x512xf32>
    %93 = vector.extract_strided_slice %1 {offsets = [2, 0], sizes = [1, 512], strides = [1, 1]} : vector<9x512xf32> to vector<1x512xf32>
    %94 = vector.broadcast %93 : vector<1x512xf32> to vector<8x512xf32>
    %95 = arith.mulf %92, %94 : vector<8x512xf32>
    %c1_i32_29 = arith.constant 1 : i32
    %96 = tpu.dynamic_rotate %82 by %c1_i32_29 dim 1 : vector<8x512xf32>, i32 -> vector<8x512xf32>
    %97 = vector.extract_strided_slice %1 {offsets = [3, 0], sizes = [1, 512], strides = [1, 1]} : vector<9x512xf32> to vector<1x512xf32>
    %98 = vector.broadcast %97 : vector<1x512xf32> to vector<8x512xf32>
    %99 = arith.mulf %96, %98 : vector<8x512xf32>
    %100 = vector.extract_strided_slice %1 {offsets = [4, 0], sizes = [1, 512], strides = [1, 1]} : vector<9x512xf32> to vector<1x512xf32>
    %101 = vector.broadcast %100 : vector<1x512xf32> to vector<8x512xf32>
    %102 = arith.mulf %82, %101 : vector<8x512xf32>
    %c511_i32_30 = arith.constant 511 : i32
    %103 = tpu.dynamic_rotate %82 by %c511_i32_30 dim 1 : vector<8x512xf32>, i32 -> vector<8x512xf32>
    %104 = vector.extract_strided_slice %1 {offsets = [5, 0], sizes = [1, 512], strides = [1, 1]} : vector<9x512xf32> to vector<1x512xf32>
    %105 = vector.broadcast %104 : vector<1x512xf32> to vector<8x512xf32>
    %106 = arith.mulf %103, %105 : vector<8x512xf32>
    %c497_i32_31 = arith.constant 497 : i32
    %107 = tpu.dynamic_rotate %82 by %c497_i32_31 dim 1 : vector<8x512xf32>, i32 -> vector<8x512xf32>
    %108 = vector.extract_strided_slice %1 {offsets = [6, 0], sizes = [1, 512], strides = [1, 1]} : vector<9x512xf32> to vector<1x512xf32>
    %109 = vector.broadcast %108 : vector<1x512xf32> to vector<8x512xf32>
    %110 = arith.mulf %107, %109 : vector<8x512xf32>
    %c496_i32_32 = arith.constant 496 : i32
    %111 = tpu.dynamic_rotate %82 by %c496_i32_32 dim 1 : vector<8x512xf32>, i32 -> vector<8x512xf32>
    %112 = vector.extract_strided_slice %1 {offsets = [7, 0], sizes = [1, 512], strides = [1, 1]} : vector<9x512xf32> to vector<1x512xf32>
    %113 = vector.broadcast %112 : vector<1x512xf32> to vector<8x512xf32>
    %114 = arith.mulf %111, %113 : vector<8x512xf32>
    %c495_i32_33 = arith.constant 495 : i32
    %115 = tpu.dynamic_rotate %82 by %c495_i32_33 dim 1 : vector<8x512xf32>, i32 -> vector<8x512xf32>
    %116 = vector.extract_strided_slice %1 {offsets = [8, 0], sizes = [1, 512], strides = [1, 1]} : vector<9x512xf32> to vector<1x512xf32>
    %117 = vector.broadcast %116 : vector<1x512xf32> to vector<8x512xf32>
    %118 = arith.mulf %115, %117 : vector<8x512xf32>
    %119 = tpu.concatenate %87, %91, %95, %99, %102, %106, %110, %114, %118 in 0 : vector<8x512xf32>, vector<8x512xf32>, vector<8x512xf32>, vector<8x512xf32>, vector<8x512xf32>, vector<8x512xf32>, vector<8x512xf32>, vector<8x512xf32>, vector<8x512xf32> -> vector<72x512xf32>
    %cst_34 = arith.constant dense<0.000000e+00> : vector<8x512xf32>
    %120 = tpu.matmul %83, %119, %cst_34 {dimension_numbers = #tpu.dot_dimension_numbers<[1], [0], [0], [1], [0, 0, 1, 1], [], []>} : vector<8x72xf32>, vector<72x512xf32>, vector<8x512xf32> -> vector<8x512xf32>
    %121 = vector.extract_strided_slice %0 {offsets = [0, 7], sizes = [8, 1], strides = [1, 1]} : vector<8x9xf32> to vector<8x1xf32>
    %122 = vector.broadcast %121 : vector<8x1xf32> to vector<8x512xf32>
    %123 = arith.mulf %120, %122 : vector<8x512xf32>
    %124 = vector.extract_strided_slice %0 {offsets = [0, 8], sizes = [8, 1], strides = [1, 1]} : vector<8x9xf32> to vector<8x1xf32>
    %125 = vector.broadcast %124 : vector<8x1xf32> to vector<8x512xf32>
    %126 = arith.addf %123, %125 : vector<8x512xf32>
    %cst_35 = arith.constant 0.000000e+00 : f32
    %127 = vector.broadcast %cst_35 : f32 to vector<8x512xf32>
    %128 = arith.maximumf %126, %127 : vector<8x512xf32>
    %c0_36 = arith.constant 0 : index
    %c0_37 = arith.constant 0 : index
    %129 = vector.load %arg11[%c0_36, %c0_37] : memref<8x512xf32, #tpu.memory_space<vmem>>, vector<8x512xf32>
    tpu.vector_store %arg11[%c0_36, %c0_37], %128 {strides = array<i32>} : memref<8x512xf32, #tpu.memory_space<vmem>>, vector<8x512xf32>,
    return
  }
  func.func @transform_0(%arg0: i32) -> (i32, i32) {
    %c0_i32 = arith.constant 0 : i32
    %c0_i32_0 = arith.constant 0 : i32
    return %c0_i32, %arg0 : i32, i32
  }
  func.func @transform_1(%arg0: i32) -> (i32, i32) {
    %c0_i32 = arith.constant 0 : i32
    %c0_i32_0 = arith.constant 0 : i32
    return %c0_i32, %arg0 : i32, i32
  }
  func.func @transform_2(%arg0: i32) -> (i32, i32) {
    %c0_i32 = arith.constant 0 : i32
    %c0_i32_0 = arith.constant 0 : i32
    %c0_i32_1 = arith.constant 0 : i32
    return %c0_i32, %c0_i32_0 : i32, i32
  }
  func.func @transform_3(%arg0: i32) -> (i32, i32) {
    %c0_i32 = arith.constant 0 : i32
    %c0_i32_0 = arith.constant 0 : i32
    %c0_i32_1 = arith.constant 0 : i32
    return %c0_i32, %c0_i32_0 : i32, i32
  }
  func.func @transform_4(%arg0: i32) -> (i32, i32) {
    %c0_i32 = arith.constant 0 : i32
    %c0_i32_0 = arith.constant 0 : i32
    %c0_i32_1 = arith.constant 0 : i32
    return %c0_i32, %c0_i32_0 : i32, i32
  }
  func.func @transform_5(%arg0: i32) -> (i32, i32) {
    %c0_i32 = arith.constant 0 : i32
    %c0_i32_0 = arith.constant 0 : i32
    %c0_i32_1 = arith.constant 0 : i32
    return %c0_i32, %c0_i32_0 : i32, i32
  }
  func.func @transform_6(%arg0: i32) -> (i32, i32) {
    %c0_i32 = arith.constant 0 : i32
    %c0_i32_0 = arith.constant 0 : i32
    %c0_i32_1 = arith.constant 0 : i32
    return %c0_i32, %c0_i32_0 : i32, i32
  }
  func.func @transform_7(%arg0: i32) -> (i32, i32) {
    %c0_i32 = arith.constant 0 : i32
    %c0_i32_0 = arith.constant 0 : i32
    %c0_i32_1 = arith.constant 0 : i32
    return %c0_i32, %c0_i32_0 : i32, i32
  }
  func.func @transform_8(%arg0: i32) -> (i32, i32) {
    %c0_i32 = arith.constant 0 : i32
    %c0_i32_0 = arith.constant 0 : i32
    %c0_i32_1 = arith.constant 0 : i32
    return %c0_i32, %c0_i32_0 : i32, i32
  }
  func.func @transform_9(%arg0: i32) -> (i32, i32) {
    %c0_i32 = arith.constant 0 : i32
    %c0_i32_0 = arith.constant 0 : i32
    %c0_i32_1 = arith.constant 0 : i32
    return %c0_i32, %c0_i32_0 : i32, i32
  }
  func.func @transform_10(%arg0: i32) -> (i32, i32) {
    %c0_i32 = arith.constant 0 : i32
    %c0_i32_0 = arith.constant 0 : i32
    return %c0_i32, %arg0 : i32, i32
  }
}

</mosaic_0001>

<llo_original>
// kernel: decoder_block_forward.1
$region0: #{decoder_block_forward.1}
  #allocation0 [shape = 'u32[]', space=smem, size = 0x4, offset = 0x4, fixed_abs, tag = 'smem constant byte address 0x4 - core index']
  #allocation1 [shape = 'u32[144,128]{1,0:T(1,128)}', space=vmem, size = 0x12000, scoped, tag = 'internal scratch']
  %s0 = inlined_call_operand.vmem [shape: f32[8,128], index: 0, kind: input, shape index: {}]
  %s1 = inlined_call_operand.vmem [shape: f32[8,512], index: 1, kind: input, shape index: {}]
  %s2 = inlined_call_operand.vmem [shape: f32[128,512], index: 2, kind: input, shape index: {}]
  %s3 = inlined_call_operand.vmem [shape: f32[9,512], index: 3, kind: input, shape index: {}]
  %s4 = inlined_call_operand.vmem [shape: f32[8,8], index: 4, kind: input, shape index: {}]
  %s5 = inlined_call_operand.vmem [shape: f32[8,8], index: 5, kind: input, shape index: {}]
  %s6 = inlined_call_operand.vmem [shape: f32[8,8], index: 6, kind: input, shape index: {}]
  %s7 = inlined_call_operand.vmem [shape: f32[8,144], index: 7, kind: input, shape index: {}]
  %s8 = inlined_call_operand.vmem [shape: f32[8,72], index: 8, kind: input, shape index: {}]
  %s9 = inlined_call_operand.vmem [shape: f32[8,9], index: 9, kind: input, shape index: {}]
  %s10 = inlined_call_operand.vmem [shape: f32[8,512], index: 10, kind: output, shape index: {}]
  %s11 = sld [smem:[#allocation0]]
  $region50: #{decoder_block_forward.1} parent=0
    _
  %s13 = ssub.s32 1, %s11
  %s14 = scalar_select 0, %s13, %s11
  // Predicated region
  $region2: #{decoder_block_forward.1} parent=0 // pred_check
    _
  $region3: #{decoder_block_forward.1} parent=0 // pred_check_branch
    %16 = sbr.rel (0) target = $region5
  $region4: #{decoder_block_forward.1} parent=0 // pred_region
    _
  $region5: #{decoder_block_forward.1} parent=0 // pred_fallthru
    _
  // Predicated region
  $region6: #{decoder_block_forward.1} parent=0 // pred_check
    _
  $region7: #{decoder_block_forward.1} parent=0 // pred_check_branch
    %18 = sbr.rel (0) target = $region9
  $region8: #{decoder_block_forward.1} parent=0 // pred_region
    _
  $region9: #{decoder_block_forward.1} parent=0 // pred_fallthru
    _
  // Predicated region
  $region10: #{decoder_block_forward.1} parent=0 // pred_check
    _
  $region11: #{decoder_block_forward.1} parent=0 // pred_check_branch
    %20 = sbr.rel (0) target = $region13
  $region12: #{decoder_block_forward.1} parent=0 // pred_region
    _
  $region13: #{decoder_block_forward.1} parent=0 // pred_fallthru
    _
  // Predicated region
  $region14: #{decoder_block_forward.1} parent=0 // pred_check
    _
  $region15: #{decoder_block_forward.1} parent=0 // pred_check_branch
    %22 = sbr.rel (0) target = $region17
  $region16: #{decoder_block_forward.1} parent=0 // pred_region
    _
  $region17: #{decoder_block_forward.1} parent=0 // pred_fallthru
    _
  // Predicated region
  $region18: #{decoder_block_forward.1} parent=0 // pred_check
    _
  $region19: #{decoder_block_forward.1} parent=0 // pred_check_branch
    %24 = sbr.rel (0) target = $region21
  $region20: #{decoder_block_forward.1} parent=0 // pred_region
    _
  $region21: #{decoder_block_forward.1} parent=0 // pred_fallthru
    _
  // Predicated region
  $region22: #{decoder_block_forward.1} parent=0 // pred_check
    _
  $region23: #{decoder_block_forward.1} parent=0 // pred_check_branch
    %26 = sbr.rel (0) target = $region25
  $region24: #{decoder_block_forward.1} parent=0 // pred_region
    _
  $region25: #{decoder_block_forward.1} parent=0 // pred_fallthru
    _
  // Predicated region
  $region26: #{decoder_block_forward.1} parent=0 // pred_check
    _
  $region27: #{decoder_block_forward.1} parent=0 // pred_check_branch
    %28 = sbr.rel (0) target = $region29
  $region28: #{decoder_block_forward.1} parent=0 // pred_region
    _
  $region29: #{decoder_block_forward.1} parent=0 // pred_fallthru
    _
  // Predicated region
  $region30: #{decoder_block_forward.1} parent=0 // pred_check
    _
  $region31: #{decoder_block_forward.1} parent=0 // pred_check_branch
    %30 = sbr.rel (0) target = $region33
  $region32: #{decoder_block_forward.1} parent=0 // pred_region
    _
  $region33: #{decoder_block_forward.1} parent=0 // pred_fallthru
    _
  // Predicated region
  $region34: #{decoder_block_forward.1} parent=0 // pred_check
    _
  $region35: #{decoder_block_forward.1} parent=0 // pred_check_branch
    %32 = sbr.rel (0) target = $region37
  $region36: #{decoder_block_forward.1} parent=0 // pred_region
    _
  $region37: #{decoder_block_forward.1} parent=0 // pred_fallthru
    _
  // Predicated region
  $region38: #{decoder_block_forward.1} parent=0 // pred_check
    _
  $region39: #{decoder_block_forward.1} parent=0 // pred_check_branch
    %34 = sbr.rel (0) target = $region41
  $region40: #{decoder_block_forward.1} parent=0 // pred_region
    _
  $region41: #{decoder_block_forward.1} parent=0 // pred_fallthru
    _
  %v35 = vld [vmem:[%s9] sm:$0xff]
  %v36 = vld [vmem:[%s3] sm:$0xff]
  %v37 = vld [vmem:[%s3 + $0x8] sm:$0xff]
  %v38 = vld [vmem:[%s3 + $0x10] sm:$0xff]
  %v39 = vld [vmem:[%s3 + $0x18] sm:$0xff]
  %v40 = vld [vmem:[%s3 + $0x20] sm:$0x1]
  %v41 = vld [vmem:[%s3 + $0x28] sm:$0x1]
  %v42 = vld [vmem:[%s3 + $0x30] sm:$0x1]
  %v43 = vld [vmem:[%s3 + $0x38] sm:$0x1]
  %v44 = vld [vmem:[%s1] sm:$0xff]
  %v45 = vld [vmem:[%s1 + $0x8] sm:$0xff]
  %v46 = vld [vmem:[%s1 + $0x10] sm:$0xff]
  %v47 = vld [vmem:[%s1 + $0x18] sm:$0xff]
  %v48 = vld [vmem:[%s0] sm:$0xff]
  %v49 = vld [vmem:[%s2] sm:$0xff]
  %v50 = vld [vmem:[%s2 + $0x8] sm:$0xff]
  %v51 = vld [vmem:[%s2 + $0x10] sm:$0xff]
  %v52 = vld [vmem:[%s2 + $0x18] sm:$0xff]
  %v53 = vld [vmem:[%s2 + $0x20] sm:$0xff]
  %v54 = vld [vmem:[%s2 + $0x28] sm:$0xff]
  %v55 = vld [vmem:[%s2 + $0x30] sm:$0xff]
  %v56 = vld [vmem:[%s2 + $0x38] sm:$0xff]
  %v57 = vld [vmem:[%s2 + $0x40] sm:$0xff]
  %v58 = vld [vmem:[%s2 + $0x48] sm:$0xff]
  %v59 = vld [vmem:[%s2 + $0x50] sm:$0xff]
  %v60 = vld [vmem:[%s2 + $0x58] sm:$0xff]
  %v61 = vld [vmem:[%s2 + $0x60] sm:$0xff]
  %v62 = vld [vmem:[%s2 + $0x68] sm:$0xff]
  %v63 = vld [vmem:[%s2 + $0x70] sm:$0xff]
  %v64 = vld [vmem:[%s2 + $0x78] sm:$0xff]
  %v65 = vld [vmem:[%s2 + $0x80] sm:$0xff]
  %v66 = vld [vmem:[%s2 + $0x88] sm:$0xff]
  %v67 = vld [vmem:[%s2 + $0x90] sm:$0xff]
  %v68 = vld [vmem:[%s2 + $0x98] sm:$0xff]
  %v69 = vld [vmem:[%s2 + $0xa0] sm:$0xff]
  %v70 = vld [vmem:[%s2 + $0xa8] sm:$0xff]
  %v71 = vld [vmem:[%s2 + $0xb0] sm:$0xff]
  %v72 = vld [vmem:[%s2 + $0xb8] sm:$0xff]
  %v73 = vld [vmem:[%s2 + $0xc0] sm:$0xff]
  %v74 = vld [vmem:[%s2 + $0xc8] sm:$0xff]
  %v75 = vld [vmem:[%s2 + $0xd0] sm:$0xff]
  %v76 = vld [vmem:[%s2 + $0xd8] sm:$0xff]
  %v77 = vld [vmem:[%s2 + $0xe0] sm:$0xff]
  %v78 = vld [vmem:[%s2 + $0xe8] sm:$0xff]
  %v79 = vld [vmem:[%s2 + $0xf0] sm:$0xff]
  %v80 = vld [vmem:[%s2 + $0xf8] sm:$0xff]
  %v81 = vld [vmem:[%s2 + $0x100] sm:$0xff]
  %v82 = vld [vmem:[%s2 + $0x108] sm:$0xff]
  %v83 = vld [vmem:[%s2 + $0x110] sm:$0xff]
  %v84 = vld [vmem:[%s2 + $0x118] sm:$0xff]
  %v85 = vld [vmem:[%s2 + $0x120] sm:$0xff]
  %v86 = vld [vmem:[%s2 + $0x128] sm:$0xff]
  %v87 = vld [vmem:[%s2 + $0x130] sm:$0xff]
  %v88 = vld [vmem:[%s2 + $0x138] sm:$0xff]
  %v89 = vld [vmem:[%s2 + $0x140] sm:$0xff]
  %v90 = vld [vmem:[%s2 + $0x148] sm:$0xff]
  %v91 = vld [vmem:[%s2 + $0x150] sm:$0xff]
  %v92 = vld [vmem:[%s2 + $0x158] sm:$0xff]
  %v93 = vld [vmem:[%s2 + $0x160] sm:$0xff]
  %v94 = vld [vmem:[%s2 + $0x168] sm:$0xff]
  %v95 = vld [vmem:[%s2 + $0x170] sm:$0xff]
  %v96 = vld [vmem:[%s2 + $0x178] sm:$0xff]
  %v97 = vld [vmem:[%s2 + $0x180] sm:$0xff]
  %v98 = vld [vmem:[%s2 + $0x188] sm:$0xff]
  %v99 = vld [vmem:[%s2 + $0x190] sm:$0xff]
  %v100 = vld [vmem:[%s2 + $0x198] sm:$0xff]
  %v101 = vld [vmem:[%s2 + $0x1a0] sm:$0xff]
  %v102 = vld [vmem:[%s2 + $0x1a8] sm:$0xff]
  %v103 = vld [vmem:[%s2 + $0x1b0] sm:$0xff]
  %v104 = vld [vmem:[%s2 + $0x1b8] sm:$0xff]
  %v105 = vld [vmem:[%s2 + $0x1c0] sm:$0xff]
  %v106 = vld [vmem:[%s2 + $0x1c8] sm:$0xff]
  %v107 = vld [vmem:[%s2 + $0x1d0] sm:$0xff]
  %v108 = vld [vmem:[%s2 + $0x1d8] sm:$0xff]
  %v109 = vld [vmem:[%s2 + $0x1e0] sm:$0xff]
  %v110 = vld [vmem:[%s2 + $0x1e8] sm:$0xff]
  %v111 = vld [vmem:[%s2 + $0x1f0] sm:$0xff]
  %v112 = vld [vmem:[%s2 + $0x1f8] sm:$0xff]
  %113 = vmatprep.subr.mxu0 %v50
  %114 = vmatpush1.msra.mxu0 %v49
  %115 = vmatprep.subr.mxu0 %v54
  %116 = vmatpush1.msra.mxu0 %v53
  %117 = vmatprep.subr.mxu0 %v58
  %118 = vmatpush1.msra.mxu0 %v57
  %119 = vmatprep.subr.mxu0 %v62
  %120 = vmatpush1.msra.mxu0 %v61
  %121 = vmatprep.subr.mxu0 %v66
  %122 = vmatpush1.msra.mxu0 %v65
  %123 = vmatprep.subr.mxu0 %v70
  %124 = vmatpush1.msra.mxu0 %v69
  %125 = vmatprep.subr.mxu0 %v74
  %126 = vmatpush1.msra.mxu0 %v73
  %127 = vmatprep.subr.mxu0 %v78
  %128 = vmatpush1.msra.mxu0 %v77
  %129 = vmatprep.subr.mxu0 %v82
  %130 = vmatpush1.msra.mxu0 %v81
  %131 = vmatprep.subr.mxu0 %v86
  %132 = vmatpush1.msra.mxu0 %v85
  %133 = vmatprep.subr.mxu0 %v90
  %134 = vmatpush1.msra.mxu0 %v89
  %135 = vmatprep.subr.mxu0 %v94
  %136 = vmatpush1.msra.mxu0 %v93
  %137 = vmatprep.subr.mxu0 %v98
  %138 = vmatpush1.msra.mxu0 %v97
  %139 = vmatprep.subr.mxu0 %v102
  %140 = vmatpush1.msra.mxu0 %v101
  %141 = vmatprep.subr.mxu0 %v106
  %142 = vmatpush1.msra.mxu0 %v105
  %143 = vmatprep.subr.mxu0 %v110
  %144 = vmatpush1.msra.mxu0 %v109
  %145 = vmatprep.subr.mxu0 0.0
  %146 = vmatpush1.msra.mxu0 0.0
  %147 = vmatprep.subr.mxu0 0.0
  %148 = vmatpush1.msra.mxu0 0.0
  %149 = vmatprep.subr.mxu0 0.0
  %150 = vmatpush1.msra.mxu0 0.0
  %151 = vmatprep.subr.mxu0 0.0
  %152 = vmatpush1.msra.mxu0 0.0
  %153 = vmatprep.subr.mxu0 0.0
  %154 = vmatpush1.msra.mxu0 0.0
  %155 = vmatprep.subr.mxu0 0.0
  %156 = vmatpush1.msra.mxu0 0.0
  %157 = vmatprep.subr.mxu0 0.0
  %158 = vmatpush1.msra.mxu0 0.0
  %159 = vmatprep.subr.mxu0 0.0
  %160 = vmatpush1.msra.mxu0 0.0
  %161 = vmatprep.subr.mxu0 0.0
  %162 = vmatpush1.msra.mxu0 0.0
  %163 = vmatprep.subr.mxu0 0.0
  %164 = vmatpush1.msra.mxu0 0.0
  %165 = vmatprep.subr.mxu0 0.0
  %166 = vmatpush1.msra.mxu0 0.0
  %167 = vmatprep.subr.mxu0 0.0
  %168 = vmatpush1.msra.mxu0 0.0
  %169 = vmatprep.subr.mxu0 0.0
  %170 = vmatpush1.msra.mxu0 0.0
  %171 = vmatprep.subr.mxu0 0.0
  %172 = vmatpush1.msra.mxu0 0.0
  %173 = vmatprep.subr.mxu0 0.0
  %174 = vmatpush1.msra.mxu0 0.0
  %175 = vmatprep.subr.mxu0 0.0
  %176 = vmatpush1.msra.mxu0 0.0
  %177 = vmatprep.mubr.f32.mxu0 0.0
  %178 = vmatmul.mubr.f32.gmra.mrb[0].mxu0 %v48
  %v179 = vpop.f32.mrb[0].mxu0
  %v180 = vadd.f32 0.0, %v179
  %v181 = vpop.f32.mrb[0].mxu0
  %v182 = vadd.f32 0.0, %v181
  %183 = vdwg.mxu0
  %184 = vmatprep.subr.mxu0 %v52
  %185 = vmatpush1.msra.mxu0 %v51
  %186 = vmatprep.subr.mxu0 %v56
  %187 = vmatpush1.msra.mxu0 %v55
  %188 = vmatprep.subr.mxu0 %v60
  %189 = vmatpush1.msra.mxu0 %v59
  %190 = vmatprep.subr.mxu0 %v64
  %191 = vmatpush1.msra.mxu0 %v63
  %192 = vmatprep.subr.mxu0 %v68
  %193 = vmatpush1.msra.mxu0 %v67
  %194 = vmatprep.subr.mxu0 %v72
  %195 = vmatpush1.msra.mxu0 %v71
  %196 = vmatprep.subr.mxu0 %v76
  %197 = vmatpush1.msra.mxu0 %v75
  %198 = vmatprep.subr.mxu0 %v80
  %199 = vmatpush1.msra.mxu0 %v79
  %200 = vmatprep.subr.mxu0 %v84
  %201 = vmatpush1.msra.mxu0 %v83
  %202 = vmatprep.subr.mxu0 %v88
  %203 = vmatpush1.msra.mxu0 %v87
  %204 = vmatprep.subr.mxu0 %v92
  %205 = vmatpush1.msra.mxu0 %v91
  %206 = vmatprep.subr.mxu0 %v96
  %207 = vmatpush1.msra.mxu0 %v95
  %208 = vmatprep.subr.mxu0 %v100
  %209 = vmatpush1.msra.mxu0 %v99
  %210 = vmatprep.subr.mxu0 %v104
  %211 = vmatpush1.msra.mxu0 %v103
  %212 = vmatprep.subr.mxu0 %v108
  %213 = vmatpush1.msra.mxu0 %v107
  %214 = vmatprep.subr.mxu0 %v112
  %215 = vmatpush1.msra.mxu0 %v111
  %216 = vmatprep.subr.mxu0 0.0
  %217 = vmatpush1.msra.mxu0 0.0
  %218 = vmatprep.subr.mxu0 0.0
  %219 = vmatpush1.msra.mxu0 0.0
  %220 = vmatprep.subr.mxu0 0.0
  %221 = vmatpush1.msra.mxu0 0.0
  %222 = vmatprep.subr.mxu0 0.0
  %223 = vmatpush1.msra.mxu0 0.0
  %224 = vmatprep.subr.mxu0 0.0
  %225 = vmatpush1.msra.mxu0 0.0
  %226 = vmatprep.subr.mxu0 0.0
  %227 = vmatpush1.msra.mxu0 0.0
  %228 = vmatprep.subr.mxu0 0.0
  %229 = vmatpush1.msra.mxu0 0.0
  %230 = vmatprep.subr.mxu0 0.0
  %231 = vmatpush1.msra.mxu0 0.0
  %232 = vmatprep.subr.mxu0 0.0
  %233 = vmatpush1.msra.mxu0 0.0
  %234 = vmatprep.subr.mxu0 0.0
  %235 = vmatpush1.msra.mxu0 0.0
  %236 = vmatprep.subr.mxu0 0.0
  %237 = vmatpush1.msra.mxu0 0.0
  %238 = vmatprep.subr.mxu0 0.0
  %239 = vmatpush1.msra.mxu0 0.0
  %240 = vmatprep.subr.mxu0 0.0
  %241 = vmatpush1.msra.mxu0 0.0
  %242 = vmatprep.subr.mxu0 0.0
  %243 = vmatpush1.msra.mxu0 0.0
  %244 = vmatprep.subr.mxu0 0.0
  %245 = vmatpush1.msra.mxu0 0.0
  %246 = vmatprep.subr.mxu0 0.0
  %247 = vmatpush1.msra.mxu0 0.0
  %248 = vmatprep.mubr.f32.mxu0 0.0
  %249 = vmatmul.mubr.f32.gmra.mrb[0].mxu0 %v48
  %v250 = vpop.f32.mrb[0].mxu0
  %v251 = vadd.f32 0.0, %v250
  %v252 = vpop.f32.mrb[0].mxu0
  %v253 = vadd.f32 0.0, %v252
  %254 = vdwg.mxu0
  %v255 = vld [vmem:[%s4] sm:$0xff]
  %vm256 = vcmask 64512
  %v258 = vsel %vm256, %v255, 0
  %260 = vmatprep.subr.mxu0 %v182
  %261 = vmatpush1.msra.mxu0 %v180
  %262 = vmatprep.subr.mxu0 0.0
  %263 = vmatpush1.msra.mxu0 0.0
  %264 = vmatprep.subr.mxu0 0.0
  %265 = vmatpush1.msra.mxu0 0.0
  %266 = vmatprep.subr.mxu0 0.0
  %267 = vmatpush1.msra.mxu0 0.0
  %268 = vmatprep.subr.mxu0 0.0
  %269 = vmatpush1.msra.mxu0 0.0
  %270 = vmatprep.subr.mxu0 0.0
  %271 = vmatpush1.msra.mxu0 0.0
  %272 = vmatprep.subr.mxu0 0.0
  %273 = vmatpush1.msra.mxu0 0.0
  %274 = vmatprep.subr.mxu0 0.0
  %275 = vmatpush1.msra.mxu0 0.0
  %276 = vmatprep.subr.mxu0 0.0
  %277 = vmatpush1.msra.mxu0 0.0
  %278 = vmatprep.subr.mxu0 0.0
  %279 = vmatpush1.msra.mxu0 0.0
  %280 = vmatprep.subr.mxu0 0.0
  %281 = vmatpush1.msra.mxu0 0.0
  %282 = vmatprep.subr.mxu0 0.0
  %283 = vmatpush1.msra.mxu0 0.0
  %284 = vmatprep.subr.mxu0 0.0
  %285 = vmatpush1.msra.mxu0 0.0
  %286 = vmatprep.subr.mxu0 0.0
  %287 = vmatpush1.msra.mxu0 0.0
  %288 = vmatprep.subr.mxu0 0.0
  %289 = vmatpush1.msra.mxu0 0.0
  %290 = vmatprep.subr.mxu0 0.0
  %291 = vmatpush1.msra.mxu0 0.0
  %292 = vmatprep.subr.mxu0 0.0
  %293 = vmatpush1.msra.mxu0 0.0
  %294 = vmatprep.subr.mxu0 0.0
  %295 = vmatpush1.msra.mxu0 0.0
  %296 = vmatprep.subr.mxu0 0.0
  %297 = vmatpush1.msra.mxu0 0.0
  %298 = vmatprep.subr.mxu0 0.0
  %299 = vmatpush1.msra.mxu0 0.0
  %300 = vmatprep.subr.mxu0 0.0
  %301 = vmatpush1.msra.mxu0 0.0
  %302 = vmatprep.subr.mxu0 0.0
  %303 = vmatpush1.msra.mxu0 0.0
  %304 = vmatprep.subr.mxu0 0.0
  %305 = vmatpush1.msra.mxu0 0.0
  %306 = vmatprep.subr.mxu0 0.0
  %307 = vmatpush1.msra.mxu0 0.0
  %308 = vmatprep.subr.mxu0 0.0
  %309 = vmatpush1.msra.mxu0 0.0
  %310 = vmatprep.subr.mxu0 0.0
  %311 = vmatpush1.msra.mxu0 0.0
  %312 = vmatprep.subr.mxu0 0.0
  %313 = vmatpush1.msra.mxu0 0.0
  %314 = vmatprep.subr.mxu0 0.0
  %315 = vmatpush1.msra.mxu0 0.0
  %316 = vmatprep.subr.mxu0 0.0
  %317 = vmatpush1.msra.mxu0 0.0
  %318 = vmatprep.subr.mxu0 0.0
  %319 = vmatpush1.msra.mxu0 0.0
  %320 = vmatprep.subr.mxu0 0.0
  %321 = vmatpush1.msra.mxu0 0.0
  %322 = vmatprep.subr.mxu0 0.0
  %323 = vmatpush1.msra.mxu0 0.0
  %324 = vmatprep.mubr.f32.mxu0 0.0
  %325 = vmatmul.mubr.f32.gmra.mrb[0].mxu0 %v258
  %v326 = vpop.f32.mrb[0].mxu0
  %v327 = vadd.f32 0.0, %v326
  %v328 = vpop.f32.mrb[0].mxu0
  %v329 = vadd.f32 0.0, %v328
  %330 = vdwg.mxu0
  %331 = vmatprep.subr.mxu0 %v253
  %332 = vmatpush1.msra.mxu0 %v251
  %333 = vmatprep.subr.mxu0 0.0
  %334 = vmatpush1.msra.mxu0 0.0
  %335 = vmatprep.subr.mxu0 0.0
  %336 = vmatpush1.msra.mxu0 0.0
  %337 = vmatprep.subr.mxu0 0.0
  %338 = vmatpush1.msra.mxu0 0.0
  %339 = vmatprep.subr.mxu0 0.0
  %340 = vmatpush1.msra.mxu0 0.0
  %341 = vmatprep.subr.mxu0 0.0
  %342 = vmatpush1.msra.mxu0 0.0
  %343 = vmatprep.subr.mxu0 0.0
  %344 = vmatpush1.msra.mxu0 0.0
  %345 = vmatprep.subr.mxu0 0.0
  %346 = vmatpush1.msra.mxu0 0.0
  %347 = vmatprep.subr.mxu0 0.0
  %348 = vmatpush1.msra.mxu0 0.0
  %349 = vmatprep.subr.mxu0 0.0
  %350 = vmatpush1.msra.mxu0 0.0
  %351 = vmatprep.subr.mxu0 0.0
  %352 = vmatpush1.msra.mxu0 0.0
  %353 = vmatprep.subr.mxu0 0.0
  %354 = vmatpush1.msra.mxu0 0.0
  %355 = vmatprep.subr.mxu0 0.0
  %356 = vmatpush1.msra.mxu0 0.0
  %357 = vmatprep.subr.mxu0 0.0
  %358 = vmatpush1.msra.mxu0 0.0
  %359 = vmatprep.subr.mxu0 0.0
  %360 = vmatpush1.msra.mxu0 0.0
  %361 = vmatprep.subr.mxu0 0.0
  %362 = vmatpush1.msra.mxu0 0.0
  %363 = vmatprep.subr.mxu0 0.0
  %364 = vmatpush1.msra.mxu0 0.0
  %365 = vmatprep.subr.mxu0 0.0
  %366 = vmatpush1.msra.mxu0 0.0
  %367 = vmatprep.subr.mxu0 0.0
  %368 = vmatpush1.msra.mxu0 0.0
  %369 = vmatprep.subr.mxu0 0.0
  %370 = vmatpush1.msra.mxu0 0.0
  %371 = vmatprep.subr.mxu0 0.0
  %372 = vmatpush1.msra.mxu0 0.0
  %373 = vmatprep.subr.mxu0 0.0
  %374 = vmatpush1.msra.mxu0 0.0
  %375 = vmatprep.subr.mxu0 0.0
  %376 = vmatpush1.msra.mxu0 0.0
  %377 = vmatprep.subr.mxu0 0.0
  %378 = vmatpush1.msra.mxu0 0.0
  %379 = vmatprep.subr.mxu0 0.0
  %380 = vmatpush1.msra.mxu0 0.0
  %381 = vmatprep.subr.mxu0 0.0
  %382 = vmatpush1.msra.mxu0 0.0
  %383 = vmatprep.subr.mxu0 0.0
  %384 = vmatpush1.msra.mxu0 0.0
  %385 = vmatprep.subr.mxu0 0.0
  %386 = vmatpush1.msra.mxu0 0.0
  %387 = vmatprep.subr.mxu0 0.0
  %388 = vmatpush1.msra.mxu0 0.0
  %389 = vmatprep.subr.mxu0 0.0
  %390 = vmatpush1.msra.mxu0 0.0
  %391 = vmatprep.subr.mxu0 0.0
  %392 = vmatpush1.msra.mxu0 0.0
  %393 = vmatprep.subr.mxu0 0.0
  %394 = vmatpush1.msra.mxu0 0.0
  %395 = vmatprep.mubr.f32.mxu0 0.0
  %396 = vmatmul.mubr.f32.gmra.mrb[0].mxu0 %v258
  %v397 = vpop.f32.mrb[0].mxu0
  %v398 = vadd.f32 0.0, %v397
  %v399 = vpop.f32.mrb[0].mxu0
  %v400 = vadd.f32 0.0, %v399
  %401 = vdwg.mxu0
  %403 = vset.pattern.permute.xlu0 0
  %404 = vperm.xlu0 %403, %v35
  %v405 = vpop.permute.xlu0 %404
  %v407 = vmul.f32 %v327, %v405
  %v408 = vmul.f32 %v329, %v405
  %v409 = vmul.f32 %v398, %v405
  %v410 = vmul.f32 %v400, %v405
  %411 = vset.pattern.permute.xlu0 1
  %412 = vperm.xlu0 %411, %v35
  %v413 = vpop.permute.xlu0 %412
  %v415 = vadd.f32 %v407, %v413
  %v416 = vadd.f32 %v408, %v413
  %v417 = vadd.f32 %v409, %v413
  %v418 = vadd.f32 %v410, %v413
  %v419 = vld [vmem:[%s5] sm:$0xff]
  %v421 = vsel %vm256, %v419, 0
  %423 = vmatprep.subr.mxu0 %v45
  %424 = vmatpush1.msra.mxu0 %v44
  %425 = vmatprep.subr.mxu0 0.0
  %426 = vmatpush1.msra.mxu0 0.0
  %427 = vmatprep.subr.mxu0 0.0
  %428 = vmatpush1.msra.mxu0 0.0
  %429 = vmatprep.subr.mxu0 0.0
  %430 = vmatpush1.msra.mxu0 0.0
  %431 = vmatprep.subr.mxu0 0.0
  %432 = vmatpush1.msra.mxu0 0.0
  %433 = vmatprep.subr.mxu0 0.0
  %434 = vmatpush1.msra.mxu0 0.0
  %435 = vmatprep.subr.mxu0 0.0
  %436 = vmatpush1.msra.mxu0 0.0
  %437 = vmatprep.subr.mxu0 0.0
  %438 = vmatpush1.msra.mxu0 0.0
  %439 = vmatprep.subr.mxu0 0.0
  %440 = vmatpush1.msra.mxu0 0.0
  %441 = vmatprep.subr.mxu0 0.0
  %442 = vmatpush1.msra.mxu0 0.0
  %443 = vmatprep.subr.mxu0 0.0
  %444 = vmatpush1.msra.mxu0 0.0
  %445 = vmatprep.subr.mxu0 0.0
  %446 = vmatpush1.msra.mxu0 0.0
  %447 = vmatprep.subr.mxu0 0.0
  %448 = vmatpush1.msra.mxu0 0.0
  %449 = vmatprep.subr.mxu0 0.0
  %450 = vmatpush1.msra.mxu0 0.0
  %451 = vmatprep.subr.mxu0 0.0
  %452 = vmatpush1.msra.mxu0 0.0
  %453 = vmatprep.subr.mxu0 0.0
  %454 = vmatpush1.msra.mxu0 0.0
  %455 = vmatprep.subr.mxu0 0.0
  %456 = vmatpush1.msra.mxu0 0.0
  %457 = vmatprep.subr.mxu0 0.0
  %458 = vmatpush1.msra.mxu0 0.0
  %459 = vmatprep.subr.mxu0 0.0
  %460 = vmatpush1.msra.mxu0 0.0
  %461 = vmatprep.subr.mxu0 0.0
  %462 = vmatpush1.msra.mxu0 0.0
  %463 = vmatprep.subr.mxu0 0.0
  %464 = vmatpush1.msra.mxu0 0.0
  %465 = vmatprep.subr.mxu0 0.0
  %466 = vmatpush1.msra.mxu0 0.0
  %467 = vmatprep.subr.mxu0 0.0
  %468 = vmatpush1.msra.mxu0 0.0
  %469 = vmatprep.subr.mxu0 0.0
  %470 = vmatpush1.msra.mxu0 0.0
  %471 = vmatprep.subr.mxu0 0.0
  %472 = vmatpush1.msra.mxu0 0.0
  %473 = vmatprep.subr.mxu0 0.0
  %474 = vmatpush1.msra.mxu0 0.0
  %475 = vmatprep.subr.mxu0 0.0
  %476 = vmatpush1.msra.mxu0 0.0
  %477 = vmatprep.subr.mxu0 0.0
  %478 = vmatpush1.msra.mxu0 0.0
  %479 = vmatprep.subr.mxu0 0.0
  %480 = vmatpush1.msra.mxu0 0.0
  %481 = vmatprep.subr.mxu0 0.0
  %482 = vmatpush1.msra.mxu0 0.0
  %483 = vmatprep.subr.mxu0 0.0
  %484 = vmatpush1.msra.mxu0 0.0
  %485 = vmatprep.subr.mxu0 0.0
  %486 = vmatpush1.msra.mxu0 0.0
  %487 = vmatprep.mubr.f32.mxu0 0.0
  %488 = vmatmul.mubr.f32.gmra.mrb[0].mxu0 %v421
  %v489 = vpop.f32.mrb[0].mxu0
  %v490 = vadd.f32 0.0, %v489
  %v491 = vpop.f32.mrb[0].mxu0
  %v492 = vadd.f32 0.0, %v491
  %493 = vdwg.mxu0
  %494 = vmatprep.subr.mxu0 %v47
  %495 = vmatpush1.msra.mxu0 %v46
  %496 = vmatprep.subr.mxu0 0.0
  %497 = vmatpush1.msra.mxu0 0.0
  %498 = vmatprep.subr.mxu0 0.0
  %499 = vmatpush1.msra.mxu0 0.0
  %500 = vmatprep.subr.mxu0 0.0
  %501 = vmatpush1.msra.mxu0 0.0
  %502 = vmatprep.subr.mxu0 0.0
  %503 = vmatpush1.msra.mxu0 0.0
  %504 = vmatprep.subr.mxu0 0.0
  %505 = vmatpush1.msra.mxu0 0.0
  %506 = vmatprep.subr.mxu0 0.0
  %507 = vmatpush1.msra.mxu0 0.0
  %508 = vmatprep.subr.mxu0 0.0
  %509 = vmatpush1.msra.mxu0 0.0
  %510 = vmatprep.subr.mxu0 0.0
  %511 = vmatpush1.msra.mxu0 0.0
  %512 = vmatprep.subr.mxu0 0.0
  %513 = vmatpush1.msra.mxu0 0.0
  %514 = vmatprep.subr.mxu0 0.0
  %515 = vmatpush1.msra.mxu0 0.0
  %516 = vmatprep.subr.mxu0 0.0
  %517 = vmatpush1.msra.mxu0 0.0
  %518 = vmatprep.subr.mxu0 0.0
  %519 = vmatpush1.msra.mxu0 0.0
  %520 = vmatprep.subr.mxu0 0.0
  %521 = vmatpush1.msra.mxu0 0.0
  %522 = vmatprep.subr.mxu0 0.0
  %523 = vmatpush1.msra.mxu0 0.0
  %524 = vmatprep.subr.mxu0 0.0
  %525 = vmatpush1.msra.mxu0 0.0
  %526 = vmatprep.subr.mxu0 0.0
  %527 = vmatpush1.msra.mxu0 0.0
  %528 = vmatprep.subr.mxu0 0.0
  %529 = vmatpush1.msra.mxu0 0.0
  %530 = vmatprep.subr.mxu0 0.0
  %531 = vmatpush1.msra.mxu0 0.0
  %532 = vmatprep.subr.mxu0 0.0
  %533 = vmatpush1.msra.mxu0 0.0
  %534 = vmatprep.subr.mxu0 0.0
  %535 = vmatpush1.msra.mxu0 0.0
  %536 = vmatprep.subr.mxu0 0.0
  %537 = vmatpush1.msra.mxu0 0.0
  %538 = vmatprep.subr.mxu0 0.0
  %539 = vmatpush1.msra.mxu0 0.0
  %540 = vmatprep.subr.mxu0 0.0
  %541 = vmatpush1.msra.mxu0 0.0
  %542 = vmatprep.subr.mxu0 0.0
  %543 = vmatpush1.msra.mxu0 0.0
  %544 = vmatprep.subr.mxu0 0.0
  %545 = vmatpush1.msra.mxu0 0.0
  %546 = vmatprep.subr.mxu0 0.0
  %547 = vmatpush1.msra.mxu0 0.0
  %548 = vmatprep.subr.mxu0 0.0
  %549 = vmatpush1.msra.mxu0 0.0
  %550 = vmatprep.subr.mxu0 0.0
  %551 = vmatpush1.msra.mxu0 0.0
  %552 = vmatprep.subr.mxu0 0.0
  %553 = vmatpush1.msra.mxu0 0.0
  %554 = vmatprep.subr.mxu0 0.0
  %555 = vmatpush1.msra.mxu0 0.0
  %556 = vmatprep.subr.mxu0 0.0
  %557 = vmatpush1.msra.mxu0 0.0
  %558 = vmatprep.mubr.f32.mxu0 0.0
  %559 = vmatmul.mubr.f32.gmra.mrb[0].mxu0 %v421
  %v560 = vpop.f32.mrb[0].mxu0
  %v561 = vadd.f32 0.0, %v560
  %v562 = vpop.f32.mrb[0].mxu0
  %v563 = vadd.f32 0.0, %v562
  %564 = vdwg.mxu0
  %565 = vset.pattern.permute.xlu0 2
  %566 = vperm.xlu0 %565, %v35
  %v567 = vpop.permute.xlu0 %566
  %v569 = vmul.f32 %v490, %v567
  %v570 = vmul.f32 %v492, %v567
  %v571 = vmul.f32 %v561, %v567
  %v572 = vmul.f32 %v563, %v567
  %573 = vset.pattern.permute.xlu0 3
  %574 = vperm.xlu0 %573, %v35
  %v575 = vpop.permute.xlu0 %574
  %v577 = vadd.f32 %v569, %v575
  %v578 = vadd.f32 %v570, %v575
  %v579 = vadd.f32 %v571, %v575
  %v580 = vadd.f32 %v572, %v575
  %v581 = vadd.f32 %v415, %v577
  %v582 = vadd.f32 %v416, %v578
  %v583 = vadd.f32 %v417, %v579
  %v584 = vadd.f32 %v418, %v580
  %v585 = vmax.f32 %v581, 0.0
  %v586 = vmax.f32 %v582, 0.0
  %v587 = vmax.f32 %v583, 0.0
  %v588 = vmax.f32 %v584, 0.0
  %v589 = vld [vmem:[%s6] sm:$0xff]
  %590 = vset.pattern.permute.xlu0 4
  %591 = vperm.xlu0 %590, %v35
  %v592 = vpop.permute.xlu0 %591
  %v595 = vsel %vm256, %v589, 0
  %597 = vmatprep.subr.mxu0 %v586
  %598 = vmatpush1.msra.mxu0 %v585
  %599 = vmatprep.subr.mxu0 0.0
  %600 = vmatpush1.msra.mxu0 0.0
  %601 = vmatprep.subr.mxu0 0.0
  %602 = vmatpush1.msra.mxu0 0.0
  %603 = vmatprep.subr.mxu0 0.0
  %604 = vmatpush1.msra.mxu0 0.0
  %605 = vmatprep.subr.mxu0 0.0
  %606 = vmatpush1.msra.mxu0 0.0
  %607 = vmatprep.subr.mxu0 0.0
  %608 = vmatpush1.msra.mxu0 0.0
  %609 = vmatprep.subr.mxu0 0.0
  %610 = vmatpush1.msra.mxu0 0.0
  %611 = vmatprep.subr.mxu0 0.0
  %612 = vmatpush1.msra.mxu0 0.0
  %613 = vmatprep.subr.mxu0 0.0
  %614 = vmatpush1.msra.mxu0 0.0
  %615 = vmatprep.subr.mxu0 0.0
  %616 = vmatpush1.msra.mxu0 0.0
  %617 = vmatprep.subr.mxu0 0.0
  %618 = vmatpush1.msra.mxu0 0.0
  %619 = vmatprep.subr.mxu0 0.0
  %620 = vmatpush1.msra.mxu0 0.0
  %621 = vmatprep.subr.mxu0 0.0
  %622 = vmatpush1.msra.mxu0 0.0
  %623 = vmatprep.subr.mxu0 0.0
  %624 = vmatpush1.msra.mxu0 0.0
  %625 = vmatprep.subr.mxu0 0.0
  %626 = vmatpush1.msra.mxu0 0.0
  %627 = vmatprep.subr.mxu0 0.0
  %628 = vmatpush1.msra.mxu0 0.0
  %629 = vmatprep.subr.mxu0 0.0
  %630 = vmatpush1.msra.mxu0 0.0
  %631 = vmatprep.subr.mxu0 0.0
  %632 = vmatpush1.msra.mxu0 0.0
  %633 = vmatprep.subr.mxu0 0.0
  %634 = vmatpush1.msra.mxu0 0.0
  %635 = vmatprep.subr.mxu0 0.0
  %636 = vmatpush1.msra.mxu0 0.0
  %637 = vmatprep.subr.mxu0 0.0
  %638 = vmatpush1.msra.mxu0 0.0
  %639 = vmatprep.subr.mxu0 0.0
  %640 = vmatpush1.msra.mxu0 0.0
  %641 = vmatprep.subr.mxu0 0.0
  %642 = vmatpush1.msra.mxu0 0.0
  %643 = vmatprep.subr.mxu0 0.0
  %644 = vmatpush1.msra.mxu0 0.0
  %645 = vmatprep.subr.mxu0 0.0
  %646 = vmatpush1.msra.mxu0 0.0
  %647 = vmatprep.subr.mxu0 0.0
  %648 = vmatpush1.msra.mxu0 0.0
  %649 = vmatprep.subr.mxu0 0.0
  %650 = vmatpush1.msra.mxu0 0.0
  %651 = vmatprep.subr.mxu0 0.0
  %652 = vmatpush1.msra.mxu0 0.0
  %653 = vmatprep.subr.mxu0 0.0
  %654 = vmatpush1.msra.mxu0 0.0
  %655 = vmatprep.subr.mxu0 0.0
  %656 = vmatpush1.msra.mxu0 0.0
  %657 = vmatprep.subr.mxu0 0.0
  %658 = vmatpush1.msra.mxu0 0.0
  %659 = vmatprep.subr.mxu0 0.0
  %660 = vmatpush1.msra.mxu0 0.0
  %661 = vmatprep.mubr.f32.mxu0 0.0
  %662 = vmatmul.mubr.f32.gmra.mrb[0].mxu0 %v595
  %v663 = vpop.f32.mrb[0].mxu0
  %v664 = vadd.f32 %v592, %v663
  %v665 = vpop.f32.mrb[0].mxu0
  %v666 = vadd.f32 %v592, %v665
  %667 = vdwg.mxu0
  %668 = vmatprep.subr.mxu0 %v588
  %669 = vmatpush1.msra.mxu0 %v587
  %670 = vmatprep.subr.mxu0 0.0
  %671 = vmatpush1.msra.mxu0 0.0
  %672 = vmatprep.subr.mxu0 0.0
  %673 = vmatpush1.msra.mxu0 0.0
  %674 = vmatprep.subr.mxu0 0.0
  %675 = vmatpush1.msra.mxu0 0.0
  %676 = vmatprep.subr.mxu0 0.0
  %677 = vmatpush1.msra.mxu0 0.0
  %678 = vmatprep.subr.mxu0 0.0
  %679 = vmatpush1.msra.mxu0 0.0
  %680 = vmatprep.subr.mxu0 0.0
  %681 = vmatpush1.msra.mxu0 0.0
  %682 = vmatprep.subr.mxu0 0.0
  %683 = vmatpush1.msra.mxu0 0.0
  %684 = vmatprep.subr.mxu0 0.0
  %685 = vmatpush1.msra.mxu0 0.0
  %686 = vmatprep.subr.mxu0 0.0
  %687 = vmatpush1.msra.mxu0 0.0
  %688 = vmatprep.subr.mxu0 0.0
  %689 = vmatpush1.msra.mxu0 0.0
  %690 = vmatprep.subr.mxu0 0.0
  %691 = vmatpush1.msra.mxu0 0.0
  %692 = vmatprep.subr.mxu0 0.0
  %693 = vmatpush1.msra.mxu0 0.0
  %694 = vmatprep.subr.mxu0 0.0
  %695 = vmatpush1.msra.mxu0 0.0
  %696 = vmatprep.subr.mxu0 0.0
  %697 = vmatpush1.msra.mxu0 0.0
  %698 = vmatprep.subr.mxu0 0.0
  %699 = vmatpush1.msra.mxu0 0.0
  %700 = vmatprep.subr.mxu0 0.0
  %701 = vmatpush1.msra.mxu0 0.0
  %702 = vmatprep.subr.mxu0 0.0
  %703 = vmatpush1.msra.mxu0 0.0
  %704 = vmatprep.subr.mxu0 0.0
  %705 = vmatpush1.msra.mxu0 0.0
  %706 = vmatprep.subr.mxu0 0.0
  %707 = vmatpush1.msra.mxu0 0.0
  %708 = vmatprep.subr.mxu0 0.0
  %709 = vmatpush1.msra.mxu0 0.0
  %710 = vmatprep.subr.mxu0 0.0
  %711 = vmatpush1.msra.mxu0 0.0
  %712 = vmatprep.subr.mxu0 0.0
  %713 = vmatpush1.msra.mxu0 0.0
  %714 = vmatprep.subr.mxu0 0.0
  %715 = vmatpush1.msra.mxu0 0.0
  %716 = vmatprep.subr.mxu0 0.0
  %717 = vmatpush1.msra.mxu0 0.0
  %718 = vmatprep.subr.mxu0 0.0
  %719 = vmatpush1.msra.mxu0 0.0
  %720 = vmatprep.subr.mxu0 0.0
  %721 = vmatpush1.msra.mxu0 0.0
  %722 = vmatprep.subr.mxu0 0.0
  %723 = vmatpush1.msra.mxu0 0.0
  %724 = vmatprep.subr.mxu0 0.0
  %725 = vmatpush1.msra.mxu0 0.0
  %726 = vmatprep.subr.mxu0 0.0
  %727 = vmatpush1.msra.mxu0 0.0
  %728 = vmatprep.subr.mxu0 0.0
  %729 = vmatpush1.msra.mxu0 0.0
  %730 = vmatprep.subr.mxu0 0.0
  %731 = vmatpush1.msra.mxu0 0.0
  %732 = vmatprep.mubr.f32.mxu0 0.0
  %733 = vmatmul.mubr.f32.gmra.mrb[0].mxu0 %v595
  %v734 = vpop.f32.mrb[0].mxu0
  %v735 = vadd.f32 %v592, %v734
  %v736 = vpop.f32.mrb[0].mxu0
  %v737 = vadd.f32 %v592, %v736
  %738 = vdwg.mxu0
  %v739 = vxor.u32 %v664, 2147483648
  %v740 = vxor.u32 %v666, 2147483648
  %v741 = vxor.u32 %v735, 2147483648
  %v742 = vxor.u32 %v737, 2147483648
  %v743 = vmul.f32 %v739, 1.442695
  %v744 = vpow.pop %v743
  %v745 = vmul.f32 %v740, 1.442695
  %v746 = vpow.pop %v745
  %v747 = vmul.f32 %v741, 1.442695
  %v748 = vpow.pop %v747
  %v749 = vmul.f32 %v742, 1.442695
  %v750 = vpow.pop %v749
  %v751 = vadd.f32 %v744, 1.0
  %v752 = vadd.f32 %v746, 1.0
  %v753 = vadd.f32 %v748, 1.0
  %v754 = vadd.f32 %v750, 1.0
  %v755 = vrcp.pop %v751
  %v756 = vmul.f32 1.0, %v755
  %v757 = vrcp.pop %v752
  %v758 = vmul.f32 1.0, %v757
  %v759 = vrcp.pop %v753
  %v760 = vmul.f32 1.0, %v759
  %v761 = vrcp.pop %v754
  %v762 = vmul.f32 1.0, %v761
  %v763 = vmul.f32 %v756, %v44
  %v764 = vmul.f32 %v758, %v45
  %v765 = vmul.f32 %v760, %v46
  %v766 = vmul.f32 %v762, %v47
  %v767 = vld [vmem:[%s7] sm:$0xff]
  %v768 = vld [vmem:[%s7 + $0x8] sm:$0xff]
  %769 = vrot.lane.b32.xlu0 %v180, 17
  %v770 = vpop.permute.xlu0 %769
  %771 = vrot.lane.b32.xlu0 %v763, 17
  %v772 = vpop.permute.xlu0 %771
  %773 = vrot.lane.b32.xlu0 %v182, 17
  %v774 = vpop.permute.xlu0 %773
  %775 = vrot.lane.b32.xlu0 %v764, 17
  %v776 = vpop.permute.xlu0 %775
  %777 = vrot.lane.b32.xlu0 %v251, 17
  %v778 = vpop.permute.xlu0 %777
  %779 = vrot.lane.b32.xlu0 %v765, 17
  %v780 = vpop.permute.xlu0 %779
  %781 = vrot.lane.b32.xlu0 %v253, 17
  %v782 = vpop.permute.xlu0 %781
  %783 = vrot.lane.b32.xlu0 %v766, 17
  %v784 = vpop.permute.xlu0 %783
  %v785 = vlaneseq
  %v786 = vand.u32 %v785, 127
  %vm787 = vcmp.lt.s32.totalorder %v786, 17
  %v788 = vsel %vm787, %v778, %v782
  %v789 = vsel %vm787, %v780, %v784
  %v790 = vsel %vm787, %v774, %v778
  %v791 = vsel %vm787, %v776, %v780
  %v792 = vsel %vm787, %v770, %v774
  %v793 = vsel %vm787, %v772, %v776
  %v794 = vsel %vm787, %v782, %v770
  %v795 = vsel %vm787, %v784, %v772
  %v796 = vlaneseq
  %v797 = vshrl.u32 %v796, 7
  %v798 = vsub.s32 0, %v797
  %v799 = vrot.slane %v36, %v798
  %v800 = vlaneseq
  %v801 = vshrl.u32 %v800, 7
  %v802 = vsub.s32 0, %v801
  %v803 = vrot.slane %v37, %v802
  %v804 = vlaneseq
  %v805 = vshrl.u32 %v804, 7
  %v806 = vsub.s32 0, %v805
  %v807 = vrot.slane %v38, %v806
  %v808 = vlaneseq
  %v809 = vshrl.u32 %v808, 7
  %v810 = vsub.s32 0, %v809
  %v811 = vrot.slane %v39, %v810
  %v812 = vmul.f32 %v794, %v799
  %v813 = vmul.f32 %v792, %v803
  %v814 = vmul.f32 %v790, %v807
  %v815 = vmul.f32 %v788, %v811
  %v816 = vmul.f32 %v795, %v799
  %v817 = vmul.f32 %v793, %v803
  %v818 = vmul.f32 %v791, %v807
  %v819 = vmul.f32 %v789, %v811
  %820 = vrot.lane.b32.xlu0 %v180, 16
  %v821 = vpop.permute.xlu0 %820
  %822 = vrot.lane.b32.xlu0 %v763, 16
  %v823 = vpop.permute.xlu0 %822
  %824 = vrot.lane.b32.xlu0 %v182, 16
  %v825 = vpop.permute.xlu0 %824
  %826 = vrot.lane.b32.xlu0 %v764, 16
  %v827 = vpop.permute.xlu0 %826
  %828 = vrot.lane.b32.xlu0 %v251, 16
  %v829 = vpop.permute.xlu0 %828
  %830 = vrot.lane.b32.xlu0 %v765, 16
  %v831 = vpop.permute.xlu0 %830
  %832 = vrot.lane.b32.xlu0 %v253, 16
  %v833 = vpop.permute.xlu0 %832
  %834 = vrot.lane.b32.xlu0 %v766, 16
  %v835 = vpop.permute.xlu0 %834
  %vm836 = vcmp.lt.s32.totalorder %v786, 16
  %v837 = vsel %vm836, %v829, %v833
  %v838 = vsel %vm836, %v831, %v835
  %v839 = vsel %vm836, %v825, %v829
  %v840 = vsel %vm836, %v827, %v831
  %v841 = vsel %vm836, %v821, %v825
  %v842 = vsel %vm836, %v823, %v827
  %v843 = vsel %vm836, %v833, %v821
  %v844 = vsel %vm836, %v835, %v823
  %v845 = vlaneseq
  %v846 = vshrl.u32 %v845, 7
  %v847 = vsub.s32 1, %v846
  %v848 = vrot.slane %v36, %v847
  %v849 = vlaneseq
  %v850 = vshrl.u32 %v849, 7
  %v851 = vsub.s32 1, %v850
  %v852 = vrot.slane %v37, %v851
  %v853 = vlaneseq
  %v854 = vshrl.u32 %v853, 7
  %v855 = vsub.s32 1, %v854
  %v856 = vrot.slane %v38, %v855
  %v857 = vlaneseq
  %v858 = vshrl.u32 %v857, 7
  %v859 = vsub.s32 1, %v858
  %v860 = vrot.slane %v39, %v859
  %v861 = vmul.f32 %v843, %v848
  %v862 = vmul.f32 %v841, %v852
  %v863 = vmul.f32 %v839, %v856
  %v864 = vmul.f32 %v837, %v860
  %v865 = vmul.f32 %v844, %v848
  %v866 = vmul.f32 %v842, %v852
  %v867 = vmul.f32 %v840, %v856
  %v868 = vmul.f32 %v838, %v860
  %869 = vrot.lane.b32.xlu0 %v180, 15
  %v870 = vpop.permute.xlu0 %869
  %871 = vrot.lane.b32.xlu0 %v763, 15
  %v872 = vpop.permute.xlu0 %871
  %873 = vrot.lane.b32.xlu0 %v182, 15
  %v874 = vpop.permute.xlu0 %873
  %875 = vrot.lane.b32.xlu0 %v764, 15
  %v876 = vpop.permute.xlu0 %875
  %877 = vrot.lane.b32.xlu0 %v251, 15
  %v878 = vpop.permute.xlu0 %877
  %879 = vrot.lane.b32.xlu0 %v765, 15
  %v880 = vpop.permute.xlu0 %879
  %881 = vrot.lane.b32.xlu0 %v253, 15
  %v882 = vpop.permute.xlu0 %881
  %883 = vrot.lane.b32.xlu0 %v766, 15
  %v884 = vpop.permute.xlu0 %883
  %vm885 = vcmp.lt.s32.totalorder %v786, 15
  %v886 = vsel %vm885, %v878, %v882
  %v887 = vsel %vm885, %v880, %v884
  %v888 = vsel %vm885, %v874, %v878
  %v889 = vsel %vm885, %v876, %v880
  %v890 = vsel %vm885, %v870, %v874
  %v891 = vsel %vm885, %v872, %v876
  %v892 = vsel %vm885, %v882, %v870
  %v893 = vsel %vm885, %v884, %v872
  %v894 = vlaneseq
  %v895 = vshrl.u32 %v894, 7
  %v896 = vsub.s32 2, %v895
  %v897 = vrot.slane %v36, %v896
  %v898 = vlaneseq
  %v899 = vshrl.u32 %v898, 7
  %v900 = vsub.s32 2, %v899
  %v901 = vrot.slane %v37, %v900
  %v902 = vlaneseq
  %v903 = vshrl.u32 %v902, 7
  %v904 = vsub.s32 2, %v903
  %v905 = vrot.slane %v38, %v904
  %v906 = vlaneseq
  %v907 = vshrl.u32 %v906, 7
  %v908 = vsub.s32 2, %v907
  %v909 = vrot.slane %v39, %v908
  %v910 = vmul.f32 %v892, %v897
  %v911 = vmul.f32 %v890, %v901
  %v912 = vmul.f32 %v888, %v905
  %v913 = vmul.f32 %v886, %v909
  %v914 = vmul.f32 %v893, %v897
  %v915 = vmul.f32 %v891, %v901
  %v916 = vmul.f32 %v889, %v905
  %v917 = vmul.f32 %v887, %v909
  %918 = vrot.lane.b32.xlu0 %v180, 1
  %v919 = vpop.permute.xlu0 %918
  %920 = vrot.lane.b32.xlu0 %v763, 1
  %v921 = vpop.permute.xlu0 %920
  %922 = vrot.lane.b32.xlu0 %v182, 1
  %v923 = vpop.permute.xlu0 %922
  %924 = vrot.lane.b32.xlu0 %v764, 1
  %v925 = vpop.permute.xlu0 %924
  %926 = vrot.lane.b32.xlu0 %v251, 1
  %v927 = vpop.permute.xlu0 %926
  %928 = vrot.lane.b32.xlu0 %v765, 1
  %v929 = vpop.permute.xlu0 %928
  %930 = vrot.lane.b32.xlu0 %v253, 1
  %v931 = vpop.permute.xlu0 %930
  %932 = vrot.lane.b32.xlu0 %v766, 1
  %v933 = vpop.permute.xlu0 %932
  %vm934 = vcmp.lt.s32.totalorder %v786, 1
  %v935 = vsel %vm934, %v927, %v931
  %v936 = vsel %vm934, %v929, %v933
  %v937 = vsel %vm934, %v923, %v927
  %v938 = vsel %vm934, %v925, %v929
  %v939 = vsel %vm934, %v919, %v923
  %v940 = vsel %vm934, %v921, %v925
  %v941 = vsel %vm934, %v931, %v919
  %v942 = vsel %vm934, %v933, %v921
  %v943 = vlaneseq
  %v944 = vshrl.u32 %v943, 7
  %v945 = vsub.s32 3, %v944
  %v946 = vrot.slane %v36, %v945
  %v947 = vlaneseq
  %v948 = vshrl.u32 %v947, 7
  %v949 = vsub.s32 3, %v948
  %v950 = vrot.slane %v37, %v949
  %v951 = vlaneseq
  %v952 = vshrl.u32 %v951, 7
  %v953 = vsub.s32 3, %v952
  %v954 = vrot.slane %v38, %v953
  %v955 = vlaneseq
  %v956 = vshrl.u32 %v955, 7
  %v957 = vsub.s32 3, %v956
  %v958 = vrot.slane %v39, %v957
  %v959 = vmul.f32 %v941, %v946
  %v960 = vmul.f32 %v939, %v950
  %v961 = vmul.f32 %v937, %v954
  %v962 = vmul.f32 %v935, %v958
  %v963 = vmul.f32 %v942, %v946
  %v964 = vmul.f32 %v940, %v950
  %v965 = vmul.f32 %v938, %v954
  %v966 = vmul.f32 %v936, %v958
  %v967 = vlaneseq
  %v968 = vshrl.u32 %v967, 7
  %v969 = vsub.s32 4, %v968
  %v970 = vrot.slane %v36, %v969
  %v971 = vlaneseq
  %v972 = vshrl.u32 %v971, 7
  %v973 = vsub.s32 4, %v972
  %v974 = vrot.slane %v37, %v973
  %v975 = vlaneseq
  %v976 = vshrl.u32 %v975, 7
  %v977 = vsub.s32 4, %v976
  %v978 = vrot.slane %v38, %v977
  %v979 = vlaneseq
  %v980 = vshrl.u32 %v979, 7
  %v981 = vsub.s32 4, %v980
  %v982 = vrot.slane %v39, %v981
  %v983 = vmul.f32 %v180, %v970
  %v984 = vmul.f32 %v182, %v974
  %v985 = vmul.f32 %v251, %v978
  %v986 = vmul.f32 %v253, %v982
  %v987 = vmul.f32 %v763, %v970
  %v988 = vmul.f32 %v764, %v974
  %v989 = vmul.f32 %v765, %v978
  %v990 = vmul.f32 %v766, %v982
  %991 = vrot.lane.b32.xlu0 %v180, 127
  %v992 = vpop.permute.xlu0 %991
  %993 = vrot.lane.b32.xlu0 %v763, 127
  %v994 = vpop.permute.xlu0 %993
  %995 = vrot.lane.b32.xlu0 %v182, 127
  %v996 = vpop.permute.xlu0 %995
  %997 = vrot.lane.b32.xlu0 %v764, 127
  %v998 = vpop.permute.xlu0 %997
  %999 = vrot.lane.b32.xlu0 %v251, 127
  %v1000 = vpop.permute.xlu0 %999
  %1001 = vrot.lane.b32.xlu0 %v765, 127
  %v1002 = vpop.permute.xlu0 %1001
  %1003 = vrot.lane.b32.xlu0 %v253, 127
  %v1004 = vpop.permute.xlu0 %1003
  %1005 = vrot.lane.b32.xlu0 %v766, 127
  %v1006 = vpop.permute.xlu0 %1005
  %vm1007 = vcmp.lt.s32.totalorder %v786, 127
  %v1008 = vsel %vm1007, %v1000, %v1004
  %v1009 = vsel %vm1007, %v1002, %v1006
  %v1010 = vsel %vm1007, %v996, %v1000
  %v1011 = vsel %vm1007, %v998, %v1002
  %v1012 = vsel %vm1007, %v992, %v996
  %v1013 = vsel %vm1007, %v994, %v998
  %v1014 = vsel %vm1007, %v1004, %v992
  %v1015 = vsel %vm1007, %v1006, %v994
  %v1016 = vlaneseq
  %v1017 = vshrl.u32 %v1016, 7
  %v1018 = vsub.s32 5, %v1017
  %v1019 = vrot.slane %v36, %v1018
  %v1020 = vlaneseq
  %v1021 = vshrl.u32 %v1020, 7
  %v1022 = vsub.s32 5, %v1021
  %v1023 = vrot.slane %v37, %v1022
  %v1024 = vlaneseq
  %v1025 = vshrl.u32 %v1024, 7
  %v1026 = vsub.s32 5, %v1025
  %v1027 = vrot.slane %v38, %v1026
  %v1028 = vlaneseq
  %v1029 = vshrl.u32 %v1028, 7
  %v1030 = vsub.s32 5, %v1029
  %v1031 = vrot.slane %v39, %v1030
  %v1032 = vmul.f32 %v1012, %v1019
  %v1033 = vmul.f32 %v1010, %v1023
  %v1034 = vmul.f32 %v1008, %v1027
  %v1035 = vmul.f32 %v1014, %v1031
  %v1036 = vmul.f32 %v1013, %v1019
  %v1037 = vmul.f32 %v1011, %v1023
  %v1038 = vmul.f32 %v1009, %v1027
  %v1039 = vmul.f32 %v1015, %v1031
  %1040 = vrot.lane.b32.xlu0 %v180, 113
  %v1041 = vpop.permute.xlu0 %1040
  %1042 = vrot.lane.b32.xlu0 %v763, 113
  %v1043 = vpop.permute.xlu0 %1042
  %1044 = vrot.lane.b32.xlu0 %v182, 113
  %v1045 = vpop.permute.xlu0 %1044
  %1046 = vrot.lane.b32.xlu0 %v764, 113
  %v1047 = vpop.permute.xlu0 %1046
  %1048 = vrot.lane.b32.xlu0 %v251, 113
  %v1049 = vpop.permute.xlu0 %1048
  %1050 = vrot.lane.b32.xlu0 %v765, 113
  %v1051 = vpop.permute.xlu0 %1050
  %1052 = vrot.lane.b32.xlu0 %v253, 113
  %v1053 = vpop.permute.xlu0 %1052
  %1054 = vrot.lane.b32.xlu0 %v766, 113
  %v1055 = vpop.permute.xlu0 %1054
  %vm1056 = vcmp.lt.s32.totalorder %v786, 113
  %v1057 = vsel %vm1056, %v1049, %v1053
  %v1058 = vsel %vm1056, %v1051, %v1055
  %v1059 = vsel %vm1056, %v1045, %v1049
  %v1060 = vsel %vm1056, %v1047, %v1051
  %v1061 = vsel %vm1056, %v1041, %v1045
  %v1062 = vsel %vm1056, %v1043, %v1047
  %v1063 = vsel %vm1056, %v1053, %v1041
  %v1064 = vsel %vm1056, %v1055, %v1043
  %v1065 = vlaneseq
  %v1066 = vshrl.u32 %v1065, 7
  %v1067 = vsub.s32 6, %v1066
  %v1068 = vrot.slane %v36, %v1067
  %v1069 = vlaneseq
  %v1070 = vshrl.u32 %v1069, 7
  %v1071 = vsub.s32 6, %v1070
  %v1072 = vrot.slane %v37, %v1071
  %v1073 = vlaneseq
  %v1074 = vshrl.u32 %v1073, 7
  %v1075 = vsub.s32 6, %v1074
  %v1076 = vrot.slane %v38, %v1075
  %v1077 = vlaneseq
  %v1078 = vshrl.u32 %v1077, 7
  %v1079 = vsub.s32 6, %v1078
  %v1080 = vrot.slane %v39, %v1079
  %v1081 = vmul.f32 %v1061, %v1068
  %v1082 = vmul.f32 %v1059, %v1072
  %v1083 = vmul.f32 %v1057, %v1076
  %v1084 = vmul.f32 %v1063, %v1080
  %v1085 = vmul.f32 %v1062, %v1068
  %v1086 = vmul.f32 %v1060, %v1072
  %v1087 = vmul.f32 %v1058, %v1076
  %v1088 = vmul.f32 %v1064, %v1080
  %1089 = vrot.lane.b32.xlu0 %v180, 112
  %v1090 = vpop.permute.xlu0 %1089
  %1091 = vrot.lane.b32.xlu0 %v763, 112
  %v1092 = vpop.permute.xlu0 %1091
  %1093 = vrot.lane.b32.xlu0 %v182, 112
  %v1094 = vpop.permute.xlu0 %1093
  %1095 = vrot.lane.b32.xlu0 %v764, 112
  %v1096 = vpop.permute.xlu0 %1095
  %1097 = vrot.lane.b32.xlu0 %v251, 112
  %v1098 = vpop.permute.xlu0 %1097
  %1099 = vrot.lane.b32.xlu0 %v765, 112
  %v1100 = vpop.permute.xlu0 %1099
  %1101 = vrot.lane.b32.xlu0 %v253, 112
  %v1102 = vpop.permute.xlu0 %1101
  %1103 = vrot.lane.b32.xlu0 %v766, 112
  %v1104 = vpop.permute.xlu0 %1103
  %vm1105 = vcmp.lt.s32.totalorder %v786, 112
  %v1106 = vsel %vm1105, %v1098, %v1102
  %v1107 = vsel %vm1105, %v1100, %v1104
  %v1108 = vsel %vm1105, %v1094, %v1098
  %v1109 = vsel %vm1105, %v1096, %v1100
  %v1110 = vsel %vm1105, %v1090, %v1094
  %v1111 = vsel %vm1105, %v1092, %v1096
  %v1112 = vsel %vm1105, %v1102, %v1090
  %v1113 = vsel %vm1105, %v1104, %v1092
  %v1114 = vlaneseq
  %v1115 = vshrl.u32 %v1114, 7
  %v1116 = vsub.s32 7, %v1115
  %v1117 = vrot.slane %v36, %v1116
  %v1118 = vlaneseq
  %v1119 = vshrl.u32 %v1118, 7
  %v1120 = vsub.s32 7, %v1119
  %v1121 = vrot.slane %v37, %v1120
  %v1122 = vlaneseq
  %v1123 = vshrl.u32 %v1122, 7
  %v1124 = vsub.s32 7, %v1123
  %v1125 = vrot.slane %v38, %v1124
  %v1126 = vlaneseq
  %v1127 = vshrl.u32 %v1126, 7
  %v1128 = vsub.s32 7, %v1127
  %v1129 = vrot.slane %v39, %v1128
  %v1130 = vmul.f32 %v1110, %v1117
  %v1131 = vmul.f32 %v1108, %v1121
  %v1132 = vmul.f32 %v1106, %v1125
  %v1133 = vmul.f32 %v1112, %v1129
  %v1134 = vmul.f32 %v1111, %v1117
  %v1135 = vmul.f32 %v1109, %v1121
  %v1136 = vmul.f32 %v1107, %v1125
  %v1137 = vmul.f32 %v1113, %v1129
  %1138 = vrot.lane.b32.xlu0 %v180, 111
  %v1139 = vpop.permute.xlu0 %1138
  %1140 = vrot.lane.b32.xlu0 %v763, 111
  %v1141 = vpop.permute.xlu0 %1140
  %1142 = vrot.lane.b32.xlu0 %v182, 111
  %v1143 = vpop.permute.xlu0 %1142
  %1144 = vrot.lane.b32.xlu0 %v764, 111
  %v1145 = vpop.permute.xlu0 %1144
  %1146 = vrot.lane.b32.xlu0 %v251, 111
  %v1147 = vpop.permute.xlu0 %1146
  %1148 = vrot.lane.b32.xlu0 %v765, 111
  %v1149 = vpop.permute.xlu0 %1148
  %1150 = vrot.lane.b32.xlu0 %v253, 111
  %v1151 = vpop.permute.xlu0 %1150
  %1152 = vrot.lane.b32.xlu0 %v766, 111
  %v1153 = vpop.permute.xlu0 %1152
  %vm1154 = vcmp.lt.s32.totalorder %v786, 111
  %v1155 = vsel %vm1154, %v1147, %v1151
  %v1156 = vsel %vm1154, %v1149, %v1153
  %v1157 = vsel %vm1154, %v1143, %v1147
  %v1158 = vsel %vm1154, %v1145, %v1149
  %v1159 = vsel %vm1154, %v1139, %v1143
  %v1160 = vsel %vm1154, %v1141, %v1145
  %v1161 = vsel %vm1154, %v1151, %v1139
  %v1162 = vsel %vm1154, %v1153, %v1141
  %v1163 = vlaneseq
  %v1164 = vshrl.u32 %v1163, 7
  %v1165 = vsub.s32 0, %v1164
  %v1166 = vrot.slane %v40, %v1165
  %v1167 = vlaneseq
  %v1168 = vshrl.u32 %v1167, 7
  %v1169 = vsub.s32 0, %v1168
  %v1170 = vrot.slane %v41, %v1169
  %v1171 = vlaneseq
  %v1172 = vshrl.u32 %v1171, 7
  %v1173 = vsub.s32 0, %v1172
  %v1174 = vrot.slane %v42, %v1173
  %v1175 = vlaneseq
  %v1176 = vshrl.u32 %v1175, 7
  %v1177 = vsub.s32 0, %v1176
  %v1178 = vrot.slane %v43, %v1177
  %v1179 = vmul.f32 %v1159, %v1166
  %v1180 = vmul.f32 %v1157, %v1170
  %v1181 = vmul.f32 %v1155, %v1174
  %v1182 = vmul.f32 %v1161, %v1178
  %v1183 = vmul.f32 %v1160, %v1166
  %v1184 = vmul.f32 %v1158, %v1170
  %v1185 = vmul.f32 %v1156, %v1174
  %v1186 = vmul.f32 %v1162, %v1178
  %vm1187 = vcmask 130048
  %v1189 = vsel %vm1187, %v768, 0
  %1191 = vmatprep.subr.mxu0 %v813
  %1192 = vmatpush1.msra.mxu0 %v812
  %1193 = vmatprep.subr.mxu0 %v817
  %1194 = vmatpush1.msra.mxu0 %v816
  %1195 = vmatprep.subr.mxu0 %v862
  %1196 = vmatpush1.msra.mxu0 %v861
  %1197 = vmatprep.subr.mxu0 %v866
  %1198 = vmatpush1.msra.mxu0 %v865
  %1199 = vmatprep.subr.mxu0 %v911
  %1200 = vmatpush1.msra.mxu0 %v910
  %1201 = vmatprep.subr.mxu0 %v915
  %1202 = vmatpush1.msra.mxu0 %v914
  %1203 = vmatprep.subr.mxu0 %v960
  %1204 = vmatpush1.msra.mxu0 %v959
  %1205 = vmatprep.subr.mxu0 %v964
  %1206 = vmatpush1.msra.mxu0 %v963
  %1207 = vmatprep.subr.mxu0 %v984
  %1208 = vmatpush1.msra.mxu0 %v983
  %1209 = vmatprep.subr.mxu0 %v988
  %1210 = vmatpush1.msra.mxu0 %v987
  %1211 = vmatprep.subr.mxu0 %v1033
  %1212 = vmatpush1.msra.mxu0 %v1032
  %1213 = vmatprep.subr.mxu0 %v1037
  %1214 = vmatpush1.msra.mxu0 %v1036
  %1215 = vmatprep.subr.mxu0 %v1082
  %1216 = vmatpush1.msra.mxu0 %v1081
  %1217 = vmatprep.subr.mxu0 %v1086
  %1218 = vmatpush1.msra.mxu0 %v1085
  %1219 = vmatprep.subr.mxu0 %v1131
  %1220 = vmatpush1.msra.mxu0 %v1130
  %1221 = vmatprep.subr.mxu0 %v1135
  %1222 = vmatpush1.msra.mxu0 %v1134
  %1223 = vmatprep.subr.mxu0 %v1180
  %1224 = vmatpush1.msra.mxu0 %v1179
  %1225 = vmatprep.subr.mxu0 %v1184
  %1226 = vmatpush1.msra.mxu0 %v1183
  %1227 = vmatprep.subr.mxu0 0.0
  %1228 = vmatpush1.msra.mxu0 0.0
  %1229 = vmatprep.subr.mxu0 0.0
  %1230 = vmatpush1.msra.mxu0 0.0
  %1231 = vmatprep.subr.mxu0 0.0
  %1232 = vmatpush1.msra.mxu0 0.0
  %1233 = vmatprep.subr.mxu0 0.0
  %1234 = vmatpush1.msra.mxu0 0.0
  %1235 = vmatprep.subr.mxu0 0.0
  %1236 = vmatpush1.msra.mxu0 0.0
  %1237 = vmatprep.subr.mxu0 0.0
  %1238 = vmatpush1.msra.mxu0 0.0
  %1239 = vmatprep.subr.mxu0 0.0
  %1240 = vmatpush1.msra.mxu0 0.0
  %1241 = vmatprep.subr.mxu0 0.0
  %1242 = vmatpush1.msra.mxu0 0.0
  %1243 = vmatprep.subr.mxu0 0.0
  %1244 = vmatpush1.msra.mxu0 0.0
  %1245 = vmatprep.subr.mxu0 0.0
  %1246 = vmatpush1.msra.mxu0 0.0
  %1247 = vmatprep.subr.mxu0 0.0
  %1248 = vmatpush1.msra.mxu0 0.0
  %1249 = vmatprep.subr.mxu0 0.0
  %1250 = vmatpush1.msra.mxu0 0.0
  %1251 = vmatprep.subr.mxu0 0.0
  %1252 = vmatpush1.msra.mxu0 0.0
  %1253 = vmatprep.subr.mxu0 0.0
  %1254 = vmatpush1.msra.mxu0 0.0
  %1255 = vmatprep.mubr.f32.mxu0 %v1189
  %1256 = vmatmul.mubr.f32.gmra.mrb[0].mxu0 %v767
  %v1257 = vpop.f32.mrb[0].mxu0
  %v1258 = vadd.f32 0.0, %v1257
  %v1259 = vpop.f32.mrb[0].mxu0
  %v1260 = vadd.f32 0.0, %v1259
  %1261 = vdwg.mxu0
  %1262 = vmatprep.subr.mxu0 %v815
  %1263 = vmatpush1.msra.mxu0 %v814
  %1264 = vmatprep.subr.mxu0 %v819
  %1265 = vmatpush1.msra.mxu0 %v818
  %1266 = vmatprep.subr.mxu0 %v864
  %1267 = vmatpush1.msra.mxu0 %v863
  %1268 = vmatprep.subr.mxu0 %v868
  %1269 = vmatpush1.msra.mxu0 %v867
  %1270 = vmatprep.subr.mxu0 %v913
  %1271 = vmatpush1.msra.mxu0 %v912
  %1272 = vmatprep.subr.mxu0 %v917
  %1273 = vmatpush1.msra.mxu0 %v916
  %1274 = vmatprep.subr.mxu0 %v962
  %1275 = vmatpush1.msra.mxu0 %v961
  %1276 = vmatprep.subr.mxu0 %v966
  %1277 = vmatpush1.msra.mxu0 %v965
  %1278 = vmatprep.subr.mxu0 %v986
  %1279 = vmatpush1.msra.mxu0 %v985
  %1280 = vmatprep.subr.mxu0 %v990
  %1281 = vmatpush1.msra.mxu0 %v989
  %1282 = vmatprep.subr.mxu0 %v1035
  %1283 = vmatpush1.msra.mxu0 %v1034
  %1284 = vmatprep.subr.mxu0 %v1039
  %1285 = vmatpush1.msra.mxu0 %v1038
  %1286 = vmatprep.subr.mxu0 %v1084
  %1287 = vmatpush1.msra.mxu0 %v1083
  %1288 = vmatprep.subr.mxu0 %v1088
  %1289 = vmatpush1.msra.mxu0 %v1087
  %1290 = vmatprep.subr.mxu0 %v1133
  %1291 = vmatpush1.msra.mxu0 %v1132
  %1292 = vmatprep.subr.mxu0 %v1137
  %1293 = vmatpush1.msra.mxu0 %v1136
  %1294 = vmatprep.subr.mxu0 %v1182
  %1295 = vmatpush1.msra.mxu0 %v1181
  %1296 = vmatprep.subr.mxu0 %v1186
  %1297 = vmatpush1.msra.mxu0 %v1185
  %1298 = vmatprep.subr.mxu0 0.0
  %1299 = vmatpush1.msra.mxu0 0.0
  %1300 = vmatprep.subr.mxu0 0.0
  %1301 = vmatpush1.msra.mxu0 0.0
  %1302 = vmatprep.subr.mxu0 0.0
  %1303 = vmatpush1.msra.mxu0 0.0
  %1304 = vmatprep.subr.mxu0 0.0
  %1305 = vmatpush1.msra.mxu0 0.0
  %1306 = vmatprep.subr.mxu0 0.0
  %1307 = vmatpush1.msra.mxu0 0.0
  %1308 = vmatprep.subr.mxu0 0.0
  %1309 = vmatpush1.msra.mxu0 0.0
  %1310 = vmatprep.subr.mxu0 0.0
  %1311 = vmatpush1.msra.mxu0 0.0
  %1312 = vmatprep.subr.mxu0 0.0
  %1313 = vmatpush1.msra.mxu0 0.0
  %1314 = vmatprep.subr.mxu0 0.0
  %1315 = vmatpush1.msra.mxu0 0.0
  %1316 = vmatprep.subr.mxu0 0.0
  %1317 = vmatpush1.msra.mxu0 0.0
  %1318 = vmatprep.subr.mxu0 0.0
  %1319 = vmatpush1.msra.mxu0 0.0
  %1320 = vmatprep.subr.mxu0 0.0
  %1321 = vmatpush1.msra.mxu0 0.0
  %1322 = vmatprep.subr.mxu0 0.0
  %1323 = vmatpush1.msra.mxu0 0.0
  %1324 = vmatprep.subr.mxu0 0.0
  %1325 = vmatpush1.msra.mxu0 0.0
  %1326 = vmatprep.mubr.f32.mxu0 %v1189
  %1327 = vmatmul.mubr.f32.gmra.mrb[0].mxu0 %v767
  %v1328 = vpop.f32.mrb[0].mxu0
  %v1329 = vadd.f32 0.0, %v1328
  %v1330 = vpop.f32.mrb[0].mxu0
  %v1331 = vadd.f32 0.0, %v1330
  %1332 = vdwg.mxu0
  %1333 = vset.pattern.permute.xlu0 5
  %1334 = vperm.xlu0 %1333, %v35
  %v1335 = vpop.permute.xlu0 %1334
  %v1337 = vmul.f32 %v1258, %v1335
  %v1338 = vmul.f32 %v1260, %v1335
  %v1339 = vmul.f32 %v1329, %v1335
  %v1340 = vmul.f32 %v1331, %v1335
  %1341 = vset.pattern.permute.xlu0 6
  %1342 = vperm.xlu0 %1341, %v35
  %v1343 = vpop.permute.xlu0 %1342
  %v1345 = vadd.f32 %v1337, %v1343
  %v1346 = vadd.f32 %v1338, %v1343
  %v1347 = vadd.f32 %v1339, %v1343
  %v1348 = vadd.f32 %v1340, %v1343
  %v1349 = vmax.f32 %v1345, 0.0
  %v1350 = vmax.f32 %v1346, 0.0
  %v1351 = vmax.f32 %v1347, 0.0
  %v1352 = vmax.f32 %v1348, 0.0
  %v1353 = vld [vmem:[%s8] sm:$0xff]
  %1354 = vrot.lane.b32.xlu0 %v1349, 17
  %v1355 = vpop.permute.xlu0 %1354
  %1356 = vrot.lane.b32.xlu0 %v1350, 17
  %v1357 = vpop.permute.xlu0 %1356
  %1358 = vrot.lane.b32.xlu0 %v1351, 17
  %v1359 = vpop.permute.xlu0 %1358
  %1360 = vrot.lane.b32.xlu0 %v1352, 17
  %v1361 = vpop.permute.xlu0 %1360
  %v1362 = vsel %vm787, %v1359, %v1361
  %v1363 = vsel %vm787, %v1357, %v1359
  %v1364 = vsel %vm787, %v1355, %v1357
  %v1365 = vsel %vm787, %v1361, %v1355
  %v1366 = vmul.f32 %v1365, %v799
  %v1367 = vmul.f32 %v1364, %v803
  %v1368 = vmul.f32 %v1363, %v807
  %v1369 = vmul.f32 %v1362, %v811
  %1370 = vrot.lane.b32.xlu0 %v1349, 16
  %v1371 = vpop.permute.xlu0 %1370
  %1372 = vrot.lane.b32.xlu0 %v1350, 16
  %v1373 = vpop.permute.xlu0 %1372
  %1374 = vrot.lane.b32.xlu0 %v1351, 16
  %v1375 = vpop.permute.xlu0 %1374
  %1376 = vrot.lane.b32.xlu0 %v1352, 16
  %v1377 = vpop.permute.xlu0 %1376
  %v1378 = vsel %vm836, %v1375, %v1377
  %v1379 = vsel %vm836, %v1373, %v1375
  %v1380 = vsel %vm836, %v1371, %v1373
  %v1381 = vsel %vm836, %v1377, %v1371
  %v1382 = vmul.f32 %v1381, %v848
  %v1383 = vmul.f32 %v1380, %v852
  %v1384 = vmul.f32 %v1379, %v856
  %v1385 = vmul.f32 %v1378, %v860
  %1386 = vrot.lane.b32.xlu0 %v1349, 15
  %v1387 = vpop.permute.xlu0 %1386
  %1388 = vrot.lane.b32.xlu0 %v1350, 15
  %v1389 = vpop.permute.xlu0 %1388
  %1390 = vrot.lane.b32.xlu0 %v1351, 15
  %v1391 = vpop.permute.xlu0 %1390
  %1392 = vrot.lane.b32.xlu0 %v1352, 15
  %v1393 = vpop.permute.xlu0 %1392
  %v1394 = vsel %vm885, %v1391, %v1393
  %v1395 = vsel %vm885, %v1389, %v1391
  %v1396 = vsel %vm885, %v1387, %v1389
  %v1397 = vsel %vm885, %v1393, %v1387
  %v1398 = vmul.f32 %v1397, %v897
  %v1399 = vmul.f32 %v1396, %v901
  %v1400 = vmul.f32 %v1395, %v905
  %v1401 = vmul.f32 %v1394, %v909
  %1402 = vrot.lane.b32.xlu0 %v1349, 1
  %v1403 = vpop.permute.xlu0 %1402
  %1404 = vrot.lane.b32.xlu0 %v1350, 1
  %v1405 = vpop.permute.xlu0 %1404
  %1406 = vrot.lane.b32.xlu0 %v1351, 1
  %v1407 = vpop.permute.xlu0 %1406
  %1408 = vrot.lane.b32.xlu0 %v1352, 1
  %v1409 = vpop.permute.xlu0 %1408
  %v1410 = vsel %vm934, %v1407, %v1409
  %v1411 = vsel %vm934, %v1405, %v1407
  %v1412 = vsel %vm934, %v1403, %v1405
  %v1413 = vsel %vm934, %v1409, %v1403
  %v1414 = vmul.f32 %v1413, %v946
  %v1415 = vmul.f32 %v1412, %v950
  %v1416 = vmul.f32 %v1411, %v954
  %v1417 = vmul.f32 %v1410, %v958
  %v1418 = vmul.f32 %v1349, %v970
  %v1419 = vmul.f32 %v1350, %v974
  %v1420 = vmul.f32 %v1351, %v978
  %v1421 = vmul.f32 %v1352, %v982
  %1422 = vrot.lane.b32.xlu0 %v1349, 127
  %v1423 = vpop.permute.xlu0 %1422
  %1424 = vrot.lane.b32.xlu0 %v1350, 127
  %v1425 = vpop.permute.xlu0 %1424
  %1426 = vrot.lane.b32.xlu0 %v1351, 127
  %v1427 = vpop.permute.xlu0 %1426
  %1428 = vrot.lane.b32.xlu0 %v1352, 127
  %v1429 = vpop.permute.xlu0 %1428
  %v1430 = vsel %vm1007, %v1427, %v1429
  %v1431 = vsel %vm1007, %v1425, %v1427
  %v1432 = vsel %vm1007, %v1423, %v1425
  %v1433 = vsel %vm1007, %v1429, %v1423
  %v1434 = vmul.f32 %v1432, %v1019
  %v1435 = vmul.f32 %v1431, %v1023
  %v1436 = vmul.f32 %v1430, %v1027
  %v1437 = vmul.f32 %v1433, %v1031
  %1438 = vrot.lane.b32.xlu0 %v1349, 113
  %v1439 = vpop.permute.xlu0 %1438
  %1440 = vrot.lane.b32.xlu0 %v1350, 113
  %v1441 = vpop.permute.xlu0 %1440
  %1442 = vrot.lane.b32.xlu0 %v1351, 113
  %v1443 = vpop.permute.xlu0 %1442
  %1444 = vrot.lane.b32.xlu0 %v1352, 113
  %v1445 = vpop.permute.xlu0 %1444
  %v1446 = vsel %vm1056, %v1443, %v1445
  %v1447 = vsel %vm1056, %v1441, %v1443
  %v1448 = vsel %vm1056, %v1439, %v1441
  %v1449 = vsel %vm1056, %v1445, %v1439
  %v1450 = vmul.f32 %v1448, %v1068
  %v1451 = vmul.f32 %v1447, %v1072
  %v1452 = vmul.f32 %v1446, %v1076
  %v1453 = vmul.f32 %v1449, %v1080
  %1454 = vrot.lane.b32.xlu0 %v1349, 112
  %v1455 = vpop.permute.xlu0 %1454
  %1456 = vrot.lane.b32.xlu0 %v1350, 112
  %v1457 = vpop.permute.xlu0 %1456
  %1458 = vrot.lane.b32.xlu0 %v1351, 112
  %v1459 = vpop.permute.xlu0 %1458
  %1460 = vrot.lane.b32.xlu0 %v1352, 112
  %v1461 = vpop.permute.xlu0 %1460
  %v1462 = vsel %vm1105, %v1459, %v1461
  %v1463 = vsel %vm1105, %v1457, %v1459
  %v1464 = vsel %vm1105, %v1455, %v1457
  %v1465 = vsel %vm1105, %v1461, %v1455
  %v1466 = vmul.f32 %v1464, %v1117
  %v1467 = vmul.f32 %v1463, %v1121
  %v1468 = vmul.f32 %v1462, %v1125
  %v1469 = vmul.f32 %v1465, %v1129
  %1470 = vrot.lane.b32.xlu0 %v1349, 111
  %v1471 = vpop.permute.xlu0 %1470
  %1472 = vrot.lane.b32.xlu0 %v1350, 111
  %v1473 = vpop.permute.xlu0 %1472
  %1474 = vrot.lane.b32.xlu0 %v1351, 111
  %v1475 = vpop.permute.xlu0 %1474
  %1476 = vrot.lane.b32.xlu0 %v1352, 111
  %v1477 = vpop.permute.xlu0 %1476
  %v1478 = vsel %vm1154, %v1475, %v1477
  %v1479 = vsel %vm1154, %v1473, %v1475
  %v1480 = vsel %vm1154, %v1471, %v1473
  %v1481 = vsel %vm1154, %v1477, %v1471
  %v1482 = vmul.f32 %v1480, %v1166
  %v1483 = vmul.f32 %v1479, %v1170
  %v1484 = vmul.f32 %v1478, %v1174
  %v1485 = vmul.f32 %v1481, %v1178
  %vm1486 = vcmask 588800
  %v1488 = vsel %vm1486, %v1353, 0
  %1490 = vmatprep.subr.mxu0 %v1367
  %1491 = vmatpush1.msra.mxu0 %v1366
  %1492 = vmatprep.subr.mxu0 %v1383
  %1493 = vmatpush1.msra.mxu0 %v1382
  %1494 = vmatprep.subr.mxu0 %v1399
  %1495 = vmatpush1.msra.mxu0 %v1398
  %1496 = vmatprep.subr.mxu0 %v1415
  %1497 = vmatpush1.msra.mxu0 %v1414
  %1498 = vmatprep.subr.mxu0 %v1419
  %1499 = vmatpush1.msra.mxu0 %v1418
  %1500 = vmatprep.subr.mxu0 %v1435
  %1501 = vmatpush1.msra.mxu0 %v1434
  %1502 = vmatprep.subr.mxu0 %v1451
  %1503 = vmatpush1.msra.mxu0 %v1450
  %1504 = vmatprep.subr.mxu0 %v1467
  %1505 = vmatpush1.msra.mxu0 %v1466
  %1506 = vmatprep.subr.mxu0 %v1483
  %1507 = vmatpush1.msra.mxu0 %v1482
  %1508 = vmatprep.subr.mxu0 0.0
  %1509 = vmatpush1.msra.mxu0 0.0
  %1510 = vmatprep.subr.mxu0 0.0
  %1511 = vmatpush1.msra.mxu0 0.0
  %1512 = vmatprep.subr.mxu0 0.0
  %1513 = vmatpush1.msra.mxu0 0.0
  %1514 = vmatprep.subr.mxu0 0.0
  %1515 = vmatpush1.msra.mxu0 0.0
  %1516 = vmatprep.subr.mxu0 0.0
  %1517 = vmatpush1.msra.mxu0 0.0
  %1518 = vmatprep.subr.mxu0 0.0
  %1519 = vmatpush1.msra.mxu0 0.0
  %1520 = vmatprep.subr.mxu0 0.0
  %1521 = vmatpush1.msra.mxu0 0.0
  %1522 = vmatprep.subr.mxu0 0.0
  %1523 = vmatpush1.msra.mxu0 0.0
  %1524 = vmatprep.subr.mxu0 0.0
  %1525 = vmatpush1.msra.mxu0 0.0
  %1526 = vmatprep.subr.mxu0 0.0
  %1527 = vmatpush1.msra.mxu0 0.0
  %1528 = vmatprep.subr.mxu0 0.0
  %1529 = vmatpush1.msra.mxu0 0.0
  %1530 = vmatprep.subr.mxu0 0.0
  %1531 = vmatpush1.msra.mxu0 0.0
  %1532 = vmatprep.subr.mxu0 0.0
  %1533 = vmatpush1.msra.mxu0 0.0
  %1534 = vmatprep.subr.mxu0 0.0
  %1535 = vmatpush1.msra.mxu0 0.0
  %1536 = vmatprep.subr.mxu0 0.0
  %1537 = vmatpush1.msra.mxu0 0.0
  %1538 = vmatprep.subr.mxu0 0.0
  %1539 = vmatpush1.msra.mxu0 0.0
  %1540 = vmatprep.subr.mxu0 0.0
  %1541 = vmatpush1.msra.mxu0 0.0
  %1542 = vmatprep.subr.mxu0 0.0
  %1543 = vmatpush1.msra.mxu0 0.0
  %1544 = vmatprep.subr.mxu0 0.0
  %1545 = vmatpush1.msra.mxu0 0.0
  %1546 = vmatprep.subr.mxu0 0.0
  %1547 = vmatpush1.msra.mxu0 0.0
  %1548 = vmatprep.subr.mxu0 0.0
  %1549 = vmatpush1.msra.mxu0 0.0
  %1550 = vmatprep.subr.mxu0 0.0
  %1551 = vmatpush1.msra.mxu0 0.0
  %1552 = vmatprep.subr.mxu0 0.0
  %1553 = vmatpush1.msra.mxu0 0.0
  %1554 = vmatprep.mubr.f32.mxu0 0.0
  %1555 = vmatmul.mubr.f32.gmra.mrb[0].mxu0 %v1488
  %v1556 = vpop.f32.mrb[0].mxu0
  %v1557 = vadd.f32 0.0, %v1556
  %v1558 = vpop.f32.mrb[0].mxu0
  %v1559 = vadd.f32 0.0, %v1558
  %1560 = vdwg.mxu0
  %1561 = vmatprep.subr.mxu0 %v1369
  %1562 = vmatpush1.msra.mxu0 %v1368
  %1563 = vmatprep.subr.mxu0 %v1385
  %1564 = vmatpush1.msra.mxu0 %v1384
  %1565 = vmatprep.subr.mxu0 %v1401
  %1566 = vmatpush1.msra.mxu0 %v1400
  %1567 = vmatprep.subr.mxu0 %v1417
  %1568 = vmatpush1.msra.mxu0 %v1416
  %1569 = vmatprep.subr.mxu0 %v1421
  %1570 = vmatpush1.msra.mxu0 %v1420
  %1571 = vmatprep.subr.mxu0 %v1437
  %1572 = vmatpush1.msra.mxu0 %v1436
  %1573 = vmatprep.subr.mxu0 %v1453
  %1574 = vmatpush1.msra.mxu0 %v1452
  %1575 = vmatprep.subr.mxu0 %v1469
  %1576 = vmatpush1.msra.mxu0 %v1468
  %1577 = vmatprep.subr.mxu0 %v1485
  %1578 = vmatpush1.msra.mxu0 %v1484
  %1579 = vmatprep.subr.mxu0 0.0
  %1580 = vmatpush1.msra.mxu0 0.0
  %1581 = vmatprep.subr.mxu0 0.0
  %1582 = vmatpush1.msra.mxu0 0.0
  %1583 = vmatprep.subr.mxu0 0.0
  %1584 = vmatpush1.msra.mxu0 0.0
  %1585 = vmatprep.subr.mxu0 0.0
  %1586 = vmatpush1.msra.mxu0 0.0
  %1587 = vmatprep.subr.mxu0 0.0
  %1588 = vmatpush1.msra.mxu0 0.0
  %1589 = vmatprep.subr.mxu0 0.0
  %1590 = vmatpush1.msra.mxu0 0.0
  %1591 = vmatprep.subr.mxu0 0.0
  %1592 = vmatpush1.msra.mxu0 0.0
  %1593 = vmatprep.subr.mxu0 0.0
  %1594 = vmatpush1.msra.mxu0 0.0
  %1595 = vmatprep.subr.mxu0 0.0
  %1596 = vmatpush1.msra.mxu0 0.0
  %1597 = vmatprep.subr.mxu0 0.0
  %1598 = vmatpush1.msra.mxu0 0.0
  %1599 = vmatprep.subr.mxu0 0.0
  %1600 = vmatpush1.msra.mxu0 0.0
  %1601 = vmatprep.subr.mxu0 0.0
  %1602 = vmatpush1.msra.mxu0 0.0
  %1603 = vmatprep.subr.mxu0 0.0
  %1604 = vmatpush1.msra.mxu0 0.0
  %1605 = vmatprep.subr.mxu0 0.0
  %1606 = vmatpush1.msra.mxu0 0.0
  %1607 = vmatprep.subr.mxu0 0.0
  %1608 = vmatpush1.msra.mxu0 0.0
  %1609 = vmatprep.subr.mxu0 0.0
  %1610 = vmatpush1.msra.mxu0 0.0
  %1611 = vmatprep.subr.mxu0 0.0
  %1612 = vmatpush1.msra.mxu0 0.0
  %1613 = vmatprep.subr.mxu0 0.0
  %1614 = vmatpush1.msra.mxu0 0.0
  %1615 = vmatprep.subr.mxu0 0.0
  %1616 = vmatpush1.msra.mxu0 0.0
  %1617 = vmatprep.subr.mxu0 0.0
  %1618 = vmatpush1.msra.mxu0 0.0
  %1619 = vmatprep.subr.mxu0 0.0
  %1620 = vmatpush1.msra.mxu0 0.0
  %1621 = vmatprep.subr.mxu0 0.0
  %1622 = vmatpush1.msra.mxu0 0.0
  %1623 = vmatprep.subr.mxu0 0.0
  %1624 = vmatpush1.msra.mxu0 0.0
  %1625 = vmatprep.mubr.f32.mxu0 0.0
  %1626 = vmatmul.mubr.f32.gmra.mrb[0].mxu0 %v1488
  %v1627 = vpop.f32.mrb[0].mxu0
  %v1628 = vadd.f32 0.0, %v1627
  %v1629 = vpop.f32.mrb[0].mxu0
  %v1630 = vadd.f32 0.0, %v1629
  %1631 = vdwg.mxu0
  %1632 = vset.pattern.permute.xlu0 7
  %1633 = vperm.xlu0 %1632, %v35
  %v1634 = vpop.permute.xlu0 %1633
  %v1636 = vmul.f32 %v1557, %v1634
  %v1637 = vmul.f32 %v1559, %v1634
  %v1638 = vmul.f32 %v1628, %v1634
  %v1639 = vmul.f32 %v1630, %v1634
  %1640 = vset.pattern.permute.xlu0 8
  %1641 = vperm.xlu0 %1640, %v35
  %v1642 = vpop.permute.xlu0 %1641
  %v1644 = vadd.f32 %v1636, %v1642
  %v1645 = vadd.f32 %v1637, %v1642
  %v1646 = vadd.f32 %v1638, %v1642
  %v1647 = vadd.f32 %v1639, %v1642
  %v1648 = vmax.f32 %v1644, 0.0
  %v1649 = vmax.f32 %v1645, 0.0
  %v1650 = vmax.f32 %v1646, 0.0
  %v1651 = vmax.f32 %v1647, 0.0
  %1652 = vst [vmem:[%s10] sm:$0xff] %v1648
  %1653 = vst [vmem:[%s10 + $0x8] sm:$0xff] %v1649
  %1654 = vst [vmem:[%s10 + $0x10] sm:$0xff] %v1650
  %1655 = vst [vmem:[%s10 + $0x18] sm:$0xff] %v1651
  // Predicated region
  $region42: #{decoder_block_forward.1} parent=0 // pred_check
    _
  $region43: #{decoder_block_forward.1} parent=0 // pred_check_branch
    %1657 = sbr.rel (0) target = $region45
  $region44: #{decoder_block_forward.1} parent=0 // pred_region
    _
  $region45: #{decoder_block_forward.1} parent=0 // pred_fallthru
    _
  // Predicated region
  $region46: #{decoder_block_forward.1} parent=0 // pred_check
    _
  $region47: #{decoder_block_forward.1} parent=0 // pred_check_branch
    %1659 = sbr.rel (0) target = $region49
  $region48: #{decoder_block_forward.1} parent=0 // pred_region
    _
  $region49: #{decoder_block_forward.1} parent=0 // pred_fallthru
    _

</llo_original>
